<compile_context>
chip_gen: v6e
topology: v6e:2x2x1
jax: 0.10.0
libtpu: 0.0.40
codegen_flags: <defaults>
</compile_context>

<pallas_src>
import functools

import jax
import jax.numpy as jnp
from jax import lax
from jax.experimental import pallas as pl
from jax.experimental.pallas import tpu as pltpu


def _round_up(x, m):
    return (x + m - 1) // m * m


def multimodal_kernel(
    text_ref, audio_ref,                                   # activations [TB, H], [TB, A_pad]
    w1_ref, b1_ref, g_ref, be_ref, w2_ref, b2_ref,         # audio encoder
    wt_ref, wa_ref, bg_ref,                                # merged text/audio projections + gate bias
    wcf_ref, bc1_ref, wc2_ref, bc2_ref,                    # classifier
    out_ref,                                               # [TB, NC_PAD]
    *, hidden_size,
):
    H = hidden_size

    text_f32 = text_ref[...].astype(jnp.float32)           # [TB, H]
    text_bf16 = text_f32.astype(jnp.bfloat16)
    audio_bf16 = audio_ref[...].astype(jnp.bfloat16)       # [TB, A_pad]

    # ---- audio encoder: Linear(A->H) + ReLU + LayerNorm(H) + Linear(H->H) + ReLU ----
    h = jnp.dot(audio_bf16, w1_ref[...], preferred_element_type=jnp.float32) + b1_ref[...]
    h = jnp.maximum(h, 0.0)
    # LayerNorm over the (un-padded, lane-aligned) H axis; eps=1e-5 like torch.nn.LayerNorm.
    mean = jnp.mean(h, axis=-1, keepdims=True)
    var = jnp.mean((h - mean) * (h - mean), axis=-1, keepdims=True)
    h = (h - mean) * lax.rsqrt(var + 1e-5) * g_ref[...] + be_ref[...]
    # Dropout(0.1) -> identity (eval)
    audio_out = jnp.dot(h.astype(jnp.bfloat16), w2_ref[...],
                        preferred_element_type=jnp.float32) + b2_ref[...]
    audio_out = jnp.maximum(audio_out, 0.0)                 # [TB, H]
    audio_out_bf16 = audio_out.astype(jnp.bfloat16)
    # dropout(0.3) on text_out / audio_out -> identity (eval)

    # ---- merged projections: one MXU push per LHS feeds both gate and classifier ----
    # wt = [wg_t | wc_t], wa = [wg_a | wc_a]; cols [0:H] -> gate, [H:H+128] -> classifier.
    tp = jnp.dot(text_bf16, wt_ref[...], preferred_element_type=jnp.float32)       # [TB, H+128]
    ap = jnp.dot(audio_out_bf16, wa_ref[...], preferred_element_type=jnp.float32)  # [TB, H+128]

    # ---- fusion gate + fusion ----
    gate = jax.nn.sigmoid(tp[:, :H] + ap[:, :H] + bg_ref[...])
    # gate*text + (1-gate)*audio  ==  audio + gate*(text - audio)   (one less VALU op)
    fused = audio_out + gate * (text_f32 - audio_out)        # [TB, H]

    # ---- classifier: Linear(3H -> 128) + ReLU + Linear(128 -> 2, padded to 128) ----
    c = (jnp.dot(fused.astype(jnp.bfloat16), wcf_ref[...],
                 preferred_element_type=jnp.float32)
         + tp[:, H:] + ap[:, H:] + bc1_ref[...])
    c = jnp.maximum(c, 0.0)                                  # [TB, 128]
    # Dropout(0.3) -> identity (eval)
    logits = jnp.dot(c.astype(jnp.bfloat16), wc2_ref[...],
                     preferred_element_type=jnp.float32) + bc2_ref[...]
    out_ref[...] = logits.astype(out_ref.dtype)              # [TB, NC_PAD] (lane-dense)


def prepare_kernel_params(p, audio_pad):
    """Pack / pad / cast the f32 reference params for the kernel (would be done once)."""
    H = p["w2"].shape[0]
    C1 = p["wc_f"].shape[1]
    n_classes = p["wc2"].shape[1]
    NC_PAD = _round_up(max(n_classes, 128), 128)
    A = p["w1"].shape[0]

    w1 = jnp.zeros((audio_pad, H), jnp.float32).at[:A].set(p["w1"]).astype(jnp.bfloat16)
    wt = jnp.concatenate([p["wg_t"], p["wc_t"]], axis=1).astype(jnp.bfloat16)   # (H, H+C1)
    wa = jnp.concatenate([p["wg_a"], p["wc_a"]], axis=1).astype(jnp.bfloat16)   # (H, H+C1)
    wc2 = (jnp.zeros((C1, NC_PAD), jnp.float32)
           .at[:, :n_classes].set(p["wc2"]).astype(jnp.bfloat16))
    bc2 = jnp.zeros((1, NC_PAD), jnp.float32).at[:, :n_classes].set(p["bc2"])

    return {
        "w1": w1, "b1": p["b1"], "ln_g": p["ln_g"], "ln_b": p["ln_b"],
        "w2": p["w2"].astype(jnp.bfloat16), "b2": p["b2"],
        "wt": wt, "wa": wa, "bg": p["bg"],
        "wc_f": p["wc_f"].astype(jnp.bfloat16), "bc1": p["bc1"],
        "wc2": wc2, "bc2": bc2,
    }


def multimodal_forward(text_out, audio_features, params, *, tb=8):
    B, H = text_out.shape
    A = audio_features.shape[1]
    assert H % 128 == 0, "hidden size must be lane-aligned (multiple of 128)"

    A_PAD = _round_up(A, 128)
    B_PAD = _round_up(B, tb)
    n_classes = params["wc2"].shape[1]
    NC_PAD = _round_up(max(n_classes, 128), 128)

    kp = prepare_kernel_params(params, A_PAD)

    # Host-side padding of the activations (zero-fill; padded rows/lanes are sliced off).
    text_p = jnp.zeros((B_PAD, H), jnp.float32).at[:B].set(text_out)
    audio_p = jnp.zeros((B_PAD, A_PAD), jnp.float32).at[:B, :A].set(audio_features)

    weight_order = ["w1", "b1", "ln_g", "ln_b", "w2", "b2",
                    "wt", "wa", "bg", "wc_f", "bc1", "wc2", "bc2"]
    weights = [kp[k] for k in weight_order]

    def act_spec(feat):
        return pl.BlockSpec((tb, feat), lambda i: (i, 0))

    def resident_spec(shape):
        # Invariant index map -> block is fetched once and stays VMEM-resident.
        return pl.BlockSpec(shape, lambda i: (0, 0))

    grid = (B_PAD // tb,)
    kernel = functools.partial(multimodal_kernel, hidden_size=H)

    out = pl.pallas_call(
        kernel,
        out_shape=jax.ShapeDtypeStruct((B_PAD, NC_PAD), jnp.float32),
        grid_spec=pltpu.PrefetchScalarGridSpec(
            num_scalar_prefetch=0,
            grid=grid,
            in_specs=[act_spec(H), act_spec(A_PAD)]
                     + [resident_spec(w.shape) for w in weights],
            out_specs=pl.BlockSpec((tb, NC_PAD), lambda i: (i, 0)),
        ),
        compiler_params=pltpu.CompilerParams(
            dimension_semantics=("parallel",),     # batch tiles shard across TCs on v7x
            vmem_limit_bytes=32 * 1024 * 1024,
        ),
    )(text_p, audio_p, *weights)

    return out[:B, :n_classes]


def init_params(key, hidden_size, audio_size, cls_hidden=128, n_classes=2):
    ks = jax.random.split(key, 12)
    scale = 0.05

    def w(k, shape):
        return (scale * jax.random.normal(k, shape)).astype(jnp.float32)

    H, A = hidden_size, audio_size
    return {
        # audio encoder
        "w1": w(ks[0], (A, H)),   "b1": w(ks[1], (1, H)),
        "ln_g": jnp.ones((1, H), jnp.float32),
        "ln_b": jnp.zeros((1, H), jnp.float32),
        "w2": w(ks[2], (H, H)),   "b2": w(ks[3], (1, H)),
        # fusion gate Linear(2H -> H) split into text/audio halves
        "wg_t": w(ks[4], (H, H)), "wg_a": w(ks[5], (H, H)), "bg": w(ks[6], (1, H)),
        # classifier Linear(3H -> 128) split into fused/text/audio thirds
        "wc_f": w(ks[7], (H, cls_hidden)),
        "wc_t": w(ks[8], (H, cls_hidden)),
        "wc_a": w(ks[9], (H, cls_hidden)),
        "bc1": w(ks[10], (1, cls_hidden)),
        # classifier Linear(128 -> 2)
        "wc2": w(ks[11], (cls_hidden, n_classes)),
        "bc2": jnp.zeros((1, n_classes), jnp.float32),
    }


def reference_forward(text_out, audio_features, p):
    """Pure-JAX f32 reference mirroring the PyTorch forward (eval mode)."""
    h = jnp.maximum(audio_features @ p["w1"] + p["b1"], 0.0)
    mean = h.mean(-1, keepdims=True)
    var = ((h - mean) ** 2).mean(-1, keepdims=True)
    h = (h - mean) / jnp.sqrt(var + 1e-5) * p["ln_g"] + p["ln_b"]
    audio_out = jnp.maximum(h @ p["w2"] + p["b2"], 0.0)
    gate = jax.nn.sigmoid(text_out @ p["wg_t"] + audio_out @ p["wg_a"] + p["bg"])
    fused = gate * text_out + (1.0 - gate) * audio_out
    c = jnp.maximum(
        fused @ p["wc_f"] + text_out @ p["wc_t"] + audio_out @ p["wc_a"] + p["bc1"], 0.0
    )
    return c @ p["wc2"] + p["bc2"]


if __name__ == "__main__":
    # TODO(synk): the pretrained BERT text tower ('bert-base-uncased') is not translatable
    # to a single Pallas kernel; its CLS output `text_out` is provided directly as an input.
    B, H, A = 16, 256, 13          # small, lane-aligned hidden size (prod would be 768)
    key = jax.random.PRNGKey(0)
    k_text, k_audio, k_params = jax.random.split(key, 3)

    text_out = jax.random.normal(k_text, (B, H), jnp.float32)       # BERT CLS embedding
    audio_features = jax.random.normal(k_audio, (B, A), jnp.float32)
    params = init_params(k_params, hidden_size=H, audio_size=A)

    logits = multimodal_forward(text_out, audio_features, params, tb=8)
    logits = jax.block_until_ready(logits)
    assert logits.shape == (B, 2)

    ref = reference_forward(text_out, audio_features, params)
    max_err = float(jnp.max(jnp.abs(logits - ref)))
    # bf16 weights / matmul LHS -> loose-but-meaningful tolerance vs the f32 reference.
    assert jnp.allclose(logits, ref, atol=1e-1, rtol=1e-1), f"mismatch vs reference: {max_err}"

    print("KERNEL_OK")
</pallas_src>

<mosaic_0001>
module attributes {stable_mosaic.version = 11 : i64} {
  func.func @multimodal_kernel(%arg0: i32, %arg1: memref<8x256xf32, #tpu.memory_space<vmem>>, %arg2: memref<8x128xf32, #tpu.memory_space<vmem>>, %arg3: memref<128x256xbf16, #tpu.memory_space<vmem>>, %arg4: memref<1x256xf32, #tpu.memory_space<vmem>>, %arg5: memref<1x256xf32, #tpu.memory_space<vmem>>, %arg6: memref<1x256xf32, #tpu.memory_space<vmem>>, %arg7: memref<256x256xbf16, #tpu.memory_space<vmem>>, %arg8: memref<1x256xf32, #tpu.memory_space<vmem>>, %arg9: memref<256x384xbf16, #tpu.memory_space<vmem>>, %arg10: memref<256x384xbf16, #tpu.memory_space<vmem>>, %arg11: memref<1x256xf32, #tpu.memory_space<vmem>>, %arg12: memref<256x128xbf16, #tpu.memory_space<vmem>>, %arg13: memref<1x128xf32, #tpu.memory_space<vmem>>, %arg14: memref<128x128xbf16, #tpu.memory_space<vmem>>, %arg15: memref<1x128xf32, #tpu.memory_space<vmem>>, %arg16: memref<8x128xf32, #tpu.memory_space<vmem>>) attributes {dimension_semantics = [#tpu.dimension_semantics<parallel>], iteration_bounds = array<i64: 2>, scalar_prefetch = 0 : i64, scratch_operands = 0 : i64, tpu.core_type = #tpu.core_type<tc>, window_params = [{transform_indices = @transform_0, window_bounds = array<i64: 8, 256>}, {transform_indices = @transform_1, window_bounds = array<i64: 8, 128>}, {pipeline_mode = #tpu.pipeline_mode<synchronous>, transform_indices = @transform_2, window_bounds = array<i64: 128, 256>}, {pipeline_mode = #tpu.pipeline_mode<synchronous>, transform_indices = @transform_3, window_bounds = array<i64: 1, 256>}, {pipeline_mode = #tpu.pipeline_mode<synchronous>, transform_indices = @transform_4, window_bounds = array<i64: 1, 256>}, {pipeline_mode = #tpu.pipeline_mode<synchronous>, transform_indices = @transform_5, window_bounds = array<i64: 1, 256>}, {pipeline_mode = #tpu.pipeline_mode<synchronous>, transform_indices = @transform_6, window_bounds = array<i64: 256, 256>}, {pipeline_mode = #tpu.pipeline_mode<synchronous>, transform_indices = @transform_7, window_bounds = array<i64: 1, 256>}, {pipeline_mode = #tpu.pipeline_mode<synchronous>, transform_indices = @transform_8, window_bounds = array<i64: 256, 384>}, {pipeline_mode = #tpu.pipeline_mode<synchronous>, transform_indices = @transform_9, window_bounds = array<i64: 256, 384>}, {pipeline_mode = #tpu.pipeline_mode<synchronous>, transform_indices = @transform_10, window_bounds = array<i64: 1, 256>}, {pipeline_mode = #tpu.pipeline_mode<synchronous>, transform_indices = @transform_11, window_bounds = array<i64: 256, 128>}, {pipeline_mode = #tpu.pipeline_mode<synchronous>, transform_indices = @transform_12, window_bounds = array<i64: 1, 128>}, {pipeline_mode = #tpu.pipeline_mode<synchronous>, transform_indices = @transform_13, window_bounds = array<i64: 128, 128>}, {pipeline_mode = #tpu.pipeline_mode<synchronous>, transform_indices = @transform_14, window_bounds = array<i64: 1, 128>}, {transform_indices = @transform_15, window_bounds = array<i64: 8, 128>}]} {
    %c0 = arith.constant 0 : index
    %c0_0 = arith.constant 0 : index
    %0 = vector.load %arg1[%c0, %c0_0] : memref<8x256xf32, #tpu.memory_space<vmem>>, vector<8x256xf32>
    %1 = arith.truncf %0 : vector<8x256xf32> to vector<8x256xbf16>
    %c0_1 = arith.constant 0 : index
    %c0_2 = arith.constant 0 : index
    %2 = vector.load %arg2[%c0_1, %c0_2] : memref<8x128xf32, #tpu.memory_space<vmem>>, vector<8x128xf32>
    %3 = arith.truncf %2 : vector<8x128xf32> to vector<8x128xbf16>
    %c0_3 = arith.constant 0 : index
    %c0_4 = arith.constant 0 : index
    %4 = vector.load %arg3[%c0_3, %c0_4] : memref<128x256xbf16, #tpu.memory_space<vmem>>, vector<128x256xbf16>
    %cst = arith.constant dense<0.000000e+00> : vector<8x256xf32>
    %5 = tpu.matmul %3, %4, %cst {dimension_numbers = #tpu.dot_dimension_numbers<[1], [0], [0], [1], [0, 0, 1, 1], [], []>} : vector<8x128xbf16>, vector<128x256xbf16>, vector<8x256xf32> -> vector<8x256xf32>
    %c0_5 = arith.constant 0 : index
    %c0_6 = arith.constant 0 : index
    %6 = vector.load %arg4[%c0_5, %c0_6] : memref<1x256xf32, #tpu.memory_space<vmem>>, vector<1x256xf32>
    %7 = vector.broadcast %6 : vector<1x256xf32> to vector<8x256xf32>
    %8 = arith.addf %5, %7 : vector<8x256xf32>
    %cst_7 = arith.constant 0.000000e+00 : f32
    %9 = vector.broadcast %cst_7 : f32 to vector<8x256xf32>
    %10 = arith.maximumf %8, %9 : vector<8x256xf32>
    %cst_8 = arith.constant dense<0.000000e+00> : vector<8xf32>
    %11 = vector.multi_reduction <add>, %10, %cst_8 [1] : vector<8x256xf32> to vector<8xf32>
    %12 = vector.shape_cast %11 : vector<8xf32> to vector<8x1xf32>
    %cst_9 = arith.constant 2.560000e+02 : f32
    %13 = vector.broadcast %cst_9 : f32 to vector<8x1xf32>
    %14 = arith.divf %12, %13 : vector<8x1xf32>
    %15 = vector.broadcast %14 : vector<8x1xf32> to vector<8x256xf32>
    %16 = arith.subf %10, %15 : vector<8x256xf32>
    %17 = vector.broadcast %14 : vector<8x1xf32> to vector<8x256xf32>
    %18 = arith.subf %10, %17 : vector<8x256xf32>
    %19 = arith.mulf %16, %18 : vector<8x256xf32>
    %cst_10 = arith.constant dense<0.000000e+00> : vector<8xf32>
    %20 = vector.multi_reduction <add>, %19, %cst_10 [1] : vector<8x256xf32> to vector<8xf32>
    %21 = vector.shape_cast %20 : vector<8xf32> to vector<8x1xf32>
    %cst_11 = arith.constant 2.560000e+02 : f32
    %22 = vector.broadcast %cst_11 : f32 to vector<8x1xf32>
    %23 = arith.divf %21, %22 : vector<8x1xf32>
    %24 = vector.broadcast %14 : vector<8x1xf32> to vector<8x256xf32>
    %25 = arith.subf %10, %24 : vector<8x256xf32>
    %cst_12 = arith.constant 9.99999974E-6 : f32
    %26 = vector.broadcast %cst_12 : f32 to vector<8x1xf32>
    %27 = arith.addf %23, %26 : vector<8x1xf32>
    %28 = math.rsqrt %27 : vector<8x1xf32>
    %29 = vector.broadcast %28 : vector<8x1xf32> to vector<8x256xf32>
    %30 = arith.mulf %25, %29 : vector<8x256xf32>
    %c0_13 = arith.constant 0 : index
    %c0_14 = arith.constant 0 : index
    %31 = vector.load %arg5[%c0_13, %c0_14] : memref<1x256xf32, #tpu.memory_space<vmem>>, vector<1x256xf32>
    %32 = vector.broadcast %31 : vector<1x256xf32> to vector<8x256xf32>
    %33 = arith.mulf %30, %32 : vector<8x256xf32>
    %c0_15 = arith.constant 0 : index
    %c0_16 = arith.constant 0 : index
    %34 = vector.load %arg6[%c0_15, %c0_16] : memref<1x256xf32, #tpu.memory_space<vmem>>, vector<1x256xf32>
    %35 = vector.broadcast %34 : vector<1x256xf32> to vector<8x256xf32>
    %36 = arith.addf %33, %35 : vector<8x256xf32>
    %37 = arith.truncf %36 : vector<8x256xf32> to vector<8x256xbf16>
    %c0_17 = arith.constant 0 : index
    %c0_18 = arith.constant 0 : index
    %38 = vector.load %arg7[%c0_17, %c0_18] : memref<256x256xbf16, #tpu.memory_space<vmem>>, vector<256x256xbf16>
    %cst_19 = arith.constant dense<0.000000e+00> : vector<8x256xf32>
    %39 = tpu.matmul %37, %38, %cst_19 {dimension_numbers = #tpu.dot_dimension_numbers<[1], [0], [0], [1], [0, 0, 1, 1], [], []>} : vector<8x256xbf16>, vector<256x256xbf16>, vector<8x256xf32> -> vector<8x256xf32>
    %c0_20 = arith.constant 0 : index
    %c0_21 = arith.constant 0 : index
    %40 = vector.load %arg8[%c0_20, %c0_21] : memref<1x256xf32, #tpu.memory_space<vmem>>, vector<1x256xf32>
    %41 = vector.broadcast %40 : vector<1x256xf32> to vector<8x256xf32>
    %42 = arith.addf %39, %41 : vector<8x256xf32>
    %cst_22 = arith.constant 0.000000e+00 : f32
    %43 = vector.broadcast %cst_22 : f32 to vector<8x256xf32>
    %44 = arith.maximumf %42, %43 : vector<8x256xf32>
    %45 = arith.truncf %44 : vector<8x256xf32> to vector<8x256xbf16>
    %c0_23 = arith.constant 0 : index
    %c0_24 = arith.constant 0 : index
    %46 = vector.load %arg9[%c0_23, %c0_24] : memref<256x384xbf16, #tpu.memory_space<vmem>>, vector<256x384xbf16>
    %cst_25 = arith.constant dense<0.000000e+00> : vector<8x384xf32>
    %47 = tpu.matmul %1, %46, %cst_25 {dimension_numbers = #tpu.dot_dimension_numbers<[1], [0], [0], [1], [0, 0, 1, 1], [], []>} : vector<8x256xbf16>, vector<256x384xbf16>, vector<8x384xf32> -> vector<8x384xf32>
    %c0_26 = arith.constant 0 : index
    %c0_27 = arith.constant 0 : index
    %48 = vector.load %arg10[%c0_26, %c0_27] : memref<256x384xbf16, #tpu.memory_space<vmem>>, vector<256x384xbf16>
    %cst_28 = arith.constant dense<0.000000e+00> : vector<8x384xf32>
    %49 = tpu.matmul %45, %48, %cst_28 {dimension_numbers = #tpu.dot_dimension_numbers<[1], [0], [0], [1], [0, 0, 1, 1], [], []>} : vector<8x256xbf16>, vector<256x384xbf16>, vector<8x384xf32> -> vector<8x384xf32>
    %50 = vector.extract_strided_slice %47 {offsets = [0, 0], sizes = [8, 256], strides = [1, 1]} : vector<8x384xf32> to vector<8x256xf32>
    %51 = vector.extract_strided_slice %49 {offsets = [0, 0], sizes = [8, 256], strides = [1, 1]} : vector<8x384xf32> to vector<8x256xf32>
    %52 = arith.addf %50, %51 : vector<8x256xf32>
    %c0_29 = arith.constant 0 : index
    %c0_30 = arith.constant 0 : index
    %53 = vector.load %arg11[%c0_29, %c0_30] : memref<1x256xf32, #tpu.memory_space<vmem>>, vector<1x256xf32>
    %54 = vector.broadcast %53 : vector<1x256xf32> to vector<8x256xf32>
    %55 = arith.addf %52, %54 : vector<8x256xf32>
    %56 = arith.negf %55 : vector<8x256xf32>
    %57 = math.exp %56 : vector<8x256xf32>
    %cst_31 = arith.constant 1.000000e+00 : f32
    %58 = vector.broadcast %cst_31 : f32 to vector<8x256xf32>
    %59 = arith.addf %58, %57 : vector<8x256xf32>
    %60 = arith.divf %58, %59 : vector<8x256xf32>
    %61 = arith.subf %0, %44 : vector<8x256xf32>
    %62 = arith.mulf %60, %61 : vector<8x256xf32>
    %63 = arith.addf %44, %62 : vector<8x256xf32>
    %64 = arith.truncf %63 : vector<8x256xf32> to vector<8x256xbf16>
    %c0_32 = arith.constant 0 : index
    %c0_33 = arith.constant 0 : index
    %65 = vector.load %arg12[%c0_32, %c0_33] : memref<256x128xbf16, #tpu.memory_space<vmem>>, vector<256x128xbf16>
    %cst_34 = arith.constant dense<0.000000e+00> : vector<8x128xf32>
    %66 = tpu.matmul %64, %65, %cst_34 {dimension_numbers = #tpu.dot_dimension_numbers<[1], [0], [0], [1], [0, 0, 1, 1], [], []>} : vector<8x256xbf16>, vector<256x128xbf16>, vector<8x128xf32> -> vector<8x128xf32>
    %67 = vector.extract_strided_slice %47 {offsets = [0, 256], sizes = [8, 128], strides = [1, 1]} : vector<8x384xf32> to vector<8x128xf32>
    %68 = arith.addf %66, %67 : vector<8x128xf32>
    %69 = vector.extract_strided_slice %49 {offsets = [0, 256], sizes = [8, 128], strides = [1, 1]} : vector<8x384xf32> to vector<8x128xf32>
    %70 = arith.addf %68, %69 : vector<8x128xf32>
    %c0_35 = arith.constant 0 : index
    %c0_36 = arith.constant 0 : index
    %71 = vector.load %arg13[%c0_35, %c0_36] : memref<1x128xf32, #tpu.memory_space<vmem>>, vector<1x128xf32>
    %72 = vector.broadcast %71 : vector<1x128xf32> to vector<8x128xf32>
    %73 = arith.addf %70, %72 : vector<8x128xf32>
    %cst_37 = arith.constant 0.000000e+00 : f32
    %74 = vector.broadcast %cst_37 : f32 to vector<8x128xf32>
    %75 = arith.maximumf %73, %74 : vector<8x128xf32>
    %76 = arith.truncf %75 : vector<8x128xf32> to vector<8x128xbf16>
    %c0_38 = arith.constant 0 : index
    %c0_39 = arith.constant 0 : index
    %77 = vector.load %arg14[%c0_38, %c0_39] : memref<128x128xbf16, #tpu.memory_space<vmem>>, vector<128x128xbf16>
    %cst_40 = arith.constant dense<0.000000e+00> : vector<8x128xf32>
    %78 = tpu.matmul %76, %77, %cst_40 {dimension_numbers = #tpu.dot_dimension_numbers<[1], [0], [0], [1], [0, 0, 1, 1], [], []>} : vector<8x128xbf16>, vector<128x128xbf16>, vector<8x128xf32> -> vector<8x128xf32>
    %c0_41 = arith.constant 0 : index
    %c0_42 = arith.constant 0 : index
    %79 = vector.load %arg15[%c0_41, %c0_42] : memref<1x128xf32, #tpu.memory_space<vmem>>, vector<1x128xf32>
    %80 = vector.broadcast %79 : vector<1x128xf32> to vector<8x128xf32>
    %81 = arith.addf %78, %80 : vector<8x128xf32>
    %c0_43 = arith.constant 0 : index
    %c0_44 = arith.constant 0 : index
    %82 = vector.load %arg16[%c0_43, %c0_44] : memref<8x128xf32, #tpu.memory_space<vmem>>, vector<8x128xf32>
    tpu.vector_store %arg16[%c0_43, %c0_44], %81 {strides = array<i32>} : memref<8x128xf32, #tpu.memory_space<vmem>>, vector<8x128xf32>,
    return
  }
  func.func @transform_0(%arg0: i32) -> (i32, i32) {
    %c0_i32 = arith.constant 0 : i32
    %c0_i32_0 = arith.constant 0 : i32
    return %arg0, %c0_i32 : i32, i32
  }
  func.func @transform_1(%arg0: i32) -> (i32, i32) {
    %c0_i32 = arith.constant 0 : i32
    %c0_i32_0 = arith.constant 0 : i32
    return %arg0, %c0_i32 : i32, i32
  }
  func.func @transform_2(%arg0: i32) -> (i32, i32) {
    %c0_i32 = arith.constant 0 : i32
    %c0_i32_0 = arith.constant 0 : i32
    %c0_i32_1 = arith.constant 0 : i32
    return %c0_i32, %c0_i32_0 : i32, i32
  }
  func.func @transform_3(%arg0: i32) -> (i32, i32) {
    %c0_i32 = arith.constant 0 : i32
    %c0_i32_0 = arith.constant 0 : i32
    %c0_i32_1 = arith.constant 0 : i32
    return %c0_i32, %c0_i32_0 : i32, i32
  }
  func.func @transform_4(%arg0: i32) -> (i32, i32) {
    %c0_i32 = arith.constant 0 : i32
    %c0_i32_0 = arith.constant 0 : i32
    %c0_i32_1 = arith.constant 0 : i32
    return %c0_i32, %c0_i32_0 : i32, i32
  }
  func.func @transform_5(%arg0: i32) -> (i32, i32) {
    %c0_i32 = arith.constant 0 : i32
    %c0_i32_0 = arith.constant 0 : i32
    %c0_i32_1 = arith.constant 0 : i32
    return %c0_i32, %c0_i32_0 : i32, i32
  }
  func.func @transform_6(%arg0: i32) -> (i32, i32) {
    %c0_i32 = arith.constant 0 : i32
    %c0_i32_0 = arith.constant 0 : i32
    %c0_i32_1 = arith.constant 0 : i32
    return %c0_i32, %c0_i32_0 : i32, i32
  }
  func.func @transform_7(%arg0: i32) -> (i32, i32) {
    %c0_i32 = arith.constant 0 : i32
    %c0_i32_0 = arith.constant 0 : i32
    %c0_i32_1 = arith.constant 0 : i32
    return %c0_i32, %c0_i32_0 : i32, i32
  }
  func.func @transform_8(%arg0: i32) -> (i32, i32) {
    %c0_i32 = arith.constant 0 : i32
    %c0_i32_0 = arith.constant 0 : i32
    %c0_i32_1 = arith.constant 0 : i32
    return %c0_i32, %c0_i32_0 : i32, i32
  }
  func.func @transform_9(%arg0: i32) -> (i32, i32) {
    %c0_i32 = arith.constant 0 : i32
    %c0_i32_0 = arith.constant 0 : i32
    %c0_i32_1 = arith.constant 0 : i32
    return %c0_i32, %c0_i32_0 : i32, i32
  }
  func.func @transform_10(%arg0: i32) -> (i32, i32) {
    %c0_i32 = arith.constant 0 : i32
    %c0_i32_0 = arith.constant 0 : i32
    %c0_i32_1 = arith.constant 0 : i32
    return %c0_i32, %c0_i32_0 : i32, i32
  }
  func.func @transform_11(%arg0: i32) -> (i32, i32) {
    %c0_i32 = arith.constant 0 : i32
    %c0_i32_0 = arith.constant 0 : i32
    %c0_i32_1 = arith.constant 0 : i32
    return %c0_i32, %c0_i32_0 : i32, i32
  }
  func.func @transform_12(%arg0: i32) -> (i32, i32) {
    %c0_i32 = arith.constant 0 : i32
    %c0_i32_0 = arith.constant 0 : i32
    %c0_i32_1 = arith.constant 0 : i32
    return %c0_i32, %c0_i32_0 : i32, i32
  }
  func.func @transform_13(%arg0: i32) -> (i32, i32) {
    %c0_i32 = arith.constant 0 : i32
    %c0_i32_0 = arith.constant 0 : i32
    %c0_i32_1 = arith.constant 0 : i32
    return %c0_i32, %c0_i32_0 : i32, i32
  }
  func.func @transform_14(%arg0: i32) -> (i32, i32) {
    %c0_i32 = arith.constant 0 : i32
    %c0_i32_0 = arith.constant 0 : i32
    %c0_i32_1 = arith.constant 0 : i32
    return %c0_i32, %c0_i32_0 : i32, i32
  }
  func.func @transform_15(%arg0: i32) -> (i32, i32) {
    %c0_i32 = arith.constant 0 : i32
    %c0_i32_0 = arith.constant 0 : i32
    return %arg0, %c0_i32 : i32, i32
  }
}

</mosaic_0001>

<llo_original>
// kernel: tpu_custom_call.1
$region0: #{tpu_custom_call.1}
  #allocation0 [shape = 'u32[]', space=smem, size = 0x4, offset = 0x4, fixed_abs, tag = 'smem constant byte address 0x4 - core index']
  #allocation1 [shape = 'u32[144,128]{1,0:T(1,128)}', space=vmem, size = 0x12000, scoped, tag = 'internal scratch']
  %s0 = inlined_call_operand.hbm [shape: f32[16,256], index: 0, kind: input, shape index: {}]
  %s1 = inlined_call_operand.hbm [shape: f32[16,128], index: 1, kind: input, shape index: {}]
  %s2 = inlined_call_operand.hbm [shape: bf16[128,256], index: 2, kind: input, shape index: {}]
  %s3 = inlined_call_operand.vmem [shape: f32[1,256], index: 3, kind: input, shape index: {}]
  %s4 = inlined_call_operand.vmem [shape: f32[1,256], index: 4, kind: input, shape index: {}]
  %s5 = inlined_call_operand.vmem [shape: f32[1,256], index: 5, kind: input, shape index: {}]
  %s6 = inlined_call_operand.hbm [shape: bf16[256,256], index: 6, kind: input, shape index: {}]
  %s7 = inlined_call_operand.vmem [shape: f32[1,256], index: 7, kind: input, shape index: {}]
  %s8 = inlined_call_operand.hbm [shape: bf16[256,384], index: 8, kind: input, shape index: {}]
  %s9 = inlined_call_operand.hbm [shape: bf16[256,384], index: 9, kind: input, shape index: {}]
  %s10 = inlined_call_operand.vmem [shape: f32[1,256], index: 10, kind: input, shape index: {}]
  %s11 = inlined_call_operand.hbm [shape: bf16[256,128], index: 11, kind: input, shape index: {}]
  %s12 = inlined_call_operand.vmem [shape: f32[1,128], index: 12, kind: input, shape index: {}]
  %s13 = inlined_call_operand.hbm [shape: bf16[128,128], index: 13, kind: input, shape index: {}]
  %s14 = inlined_call_operand.vmem [shape: f32[1,128], index: 14, kind: input, shape index: {}]
  %s15 = inlined_call_operand.hbm [shape: f32[16,128], index: 15, kind: output, shape index: {}]
  %s16 = sld [smem:[#allocation0]]
  $region125: #{tpu_custom_call.1} parent=0
    _
  %s18 = ssub.s32 1, %s16
  %s19 = scalar_select 0, %s18, %s16
  $region1: #{tpu_custom_call.1} parent=0
    #allocation2 [shape = 'u8[16384]{0}', space=vmem, size = 0x4000, scoped, tag = 'input window, operand 0']
    #allocation3 [shape = 's32[2]{0}', space=sflag, size = 0x8, scoped, tag = 'scoped memory for tpu_custom_call.1']
    #allocation4 [shape = 's32[2]{0}', space=sflag, size = 0x8, scoped, tag = 'scoped memory for tpu_custom_call.1']
    #allocation5 [shape = 'u8[8192]{0}', space=vmem, size = 0x2000, scoped, tag = 'input window, operand 1']
    #allocation6 [shape = 's32[2]{0}', space=sflag, size = 0x8, scoped, tag = 'scoped memory for tpu_custom_call.1']
    #allocation7 [shape = 'u8[65536]{0}', space=vmem, size = 0x10000, scoped, tag = 'input window, operand 2, single buffered']
    #allocation8 [shape = 'u8[131072]{0}', space=vmem, size = 0x20000, scoped, tag = 'input window, operand 6, single buffered']
    #allocation9 [shape = 's32[1]{0}', space=sflag, size = 0x4, scoped, tag = 'scoped memory for tpu_custom_call.1']
    #allocation10 [shape = 'u8[196608]{0}', space=vmem, size = 0x30000, scoped, tag = 'input window, operand 8, single buffered']
    #allocation11 [shape = 'u8[196608]{0}', space=vmem, size = 0x30000, scoped, tag = 'input window, operand 9, single buffered']
    #allocation12 [shape = 's32[1]{0}', space=sflag, size = 0x4, scoped, tag = 'scoped memory for tpu_custom_call.1']
    #allocation13 [shape = 'u8[65536]{0}', space=vmem, size = 0x10000, scoped, tag = 'input window, operand 11, single buffered']
    #allocation14 [shape = 'u8[32768]{0}', space=vmem, size = 0x8000, scoped, tag = 'input window, operand 13, single buffered']
    #allocation15 [shape = 's32[1]{0}', space=sflag, size = 0x4, scoped, tag = 'scoped memory for tpu_custom_call.1']
    #allocation16 [shape = 'u8[8192]{0}', space=vmem, size = 0x2000, scoped, tag = 'output window, operand 0']
    %20 = vsyncpa [#allocation3], 0
    %s21 = scalar_lea.sflag [#allocation3], 1
    %22 = vsyncpa %s21, 0
    %23 = vsyncpa [#allocation6], 0
    %s24 = scalar_lea.sflag [#allocation6], 1
    %25 = vsyncpa %s24, 0
    %26 = vsyncpa [#allocation9], 0
    %27 = vsyncpa [#allocation12], 0
    %28 = vsyncpa [#allocation15], 0
    %29 = vsyncpa [#allocation4], 0
    %s30 = scalar_lea.sflag [#allocation4], 1
    %31 = vsyncpa %s30, 0
    loop: start=0, step=1, limit=4
    $region2: #{tpu_custom_call.1} parent=1 // loop_pre_header
      _
    $region3: #{tpu_custom_call.1} parent=1 // loop_header
      %s33 = sphi 0, %s37
      %p34 = scmp.ge.s32.totalorder %s33, 4
      %s43 = sphi 0, %s45
      %s46 = sphi 0, %s43
      %s47 = sphi 0, %s46
      %s63 = sphi 0, %s47
      %s69 = sphi 0, %s71
      %s72 = sphi 0, %s69
      %s73 = sphi 0, %s72
      %s89 = sphi 0, %s73
      %s93 = sphi 0, %s93
      %s95 = sphi 0, %s93
      %s96 = sphi 0, %s95
      %s110 = sphi 0, %s96
      %s114 = sphi 0, %s114
      %s116 = sphi 0, %s114
      %s117 = sphi 0, %s116
      %s131 = sphi 0, %s117
      %s135 = sphi 0, %s135
      %s137 = sphi 0, %s135
      %s138 = sphi 0, %s137
      %s152 = sphi 0, %s138
      %s156 = sphi 0, %s156
      %s158 = sphi 0, %s156
      %s159 = sphi 0, %s158
      %s173 = sphi 0, %s159
      %s177 = sphi 0, %s177
      %s179 = sphi 0, %s177
      %s180 = sphi 0, %s179
      %s194 = sphi 0, %s180
      %s198 = sphi 0, %s198
      %s200 = sphi 0, %s198
      %s201 = sphi 0, %s200
      %s215 = sphi 0, %s201
      %s219 = sphi 0, %s219
      %s221 = sphi 0, %s219
      %s222 = sphi 0, %s221
      %s236 = sphi 0, %s222
      %s240 = sphi 0, %s240
      %s242 = sphi 0, %s240
      %s243 = sphi 0, %s242
      %s257 = sphi 0, %s243
      %s261 = sphi 0, %s261
      %s263 = sphi 0, %s261
      %s264 = sphi 0, %s263
      %s278 = sphi 0, %s264
      %s282 = sphi 0, %s282
      %s284 = sphi 0, %s282
      %s285 = sphi 0, %s284
      %s299 = sphi 0, %s285
      %s303 = sphi 0, %s303
      %s305 = sphi 0, %s303
      %s306 = sphi 0, %s305
      %s320 = sphi 0, %s306
      %s324 = sphi 0, %s324
      %s326 = sphi 0, %s324
      %s327 = sphi 0, %s326
      %s341 = sphi 0, %s327
      %s345 = sphi 0, %s345
      %s347 = sphi 0, %s345
      %s348 = sphi 0, %s347
      %s362 = sphi 0, %s348
      %s368 = sphi 0, %s370
      %s371 = sphi 0, %s368
      %s372 = sphi 0, %s371
      %s388 = sphi 0, %s372
    $region4: #{tpu_custom_call.1} parent=1 // loop_header_branch
      %36 = sbr.rel (%p34) target = $region8
    $region5: #{tpu_custom_call.1} parent=1 // loop_body
      %s38 = ssub.s32 %s33, 1
      %s39 = ssub.s32 %s33, 2
      %s40 = sadd.s32 %s33, 1
      %s41 = ssub.s32 %s33, %s40
      %p42 = scmp.eq.s32.totalorder %s41, 0
      %s44 = sadd.s32 %s43, 1
      %s45 = scalar_select %p42, %s43, %s44
      %p48 = pneg %p42
      %p49 = scmp.eq.s32.totalorder %s33, 1
      %p50 = por %p48, %p49
      %p51 = scmp.ne.s32.totalorder %s43, %s46
      %p52 = scmp.eq.s32.totalorder %s33, 0
      %p53 = por %p51, %p52
      %p54 = scmp.ne.s32.totalorder %s43, %s46
      %p55 = scmp.eq.s32.totalorder %s38, 1
      %p56 = por %p54, %p55
      %p57 = scmp.ne.s32.totalorder %s46, %s47
      %p58 = scmp.eq.s32.totalorder %s38, 0
      %p59 = por %p57, %p58
      %p60 = scmp.ne.s32.totalorder %s46, %s47
      %p61 = scmp.eq.s32.totalorder %s39, 1
      %p62 = por %p60, %p61
      %p64 = scmp.ne.s32.totalorder %s47, %s63
      %p65 = scmp.eq.s32.totalorder %s39, 0
      %p66 = por %p64, %p65
      %s67 = ssub.s32 %s33, %s40
      %p68 = scmp.eq.s32.totalorder %s67, 0
      %s70 = sadd.s32 %s69, 1
      %s71 = scalar_select %p68, %s69, %s70
      %p74 = pneg %p68
      %p75 = scmp.eq.s32.totalorder %s33, 1
      %p76 = por %p74, %p75
      %p77 = scmp.ne.s32.totalorder %s69, %s72
      %p78 = scmp.eq.s32.totalorder %s33, 0
      %p79 = por %p77, %p78
      %p80 = scmp.ne.s32.totalorder %s69, %s72
      %p81 = scmp.eq.s32.totalorder %s38, 1
      %p82 = por %p80, %p81
      %p83 = scmp.ne.s32.totalorder %s72, %s73
      %p84 = scmp.eq.s32.totalorder %s38, 0
      %p85 = por %p83, %p84
      %p86 = scmp.ne.s32.totalorder %s72, %s73
      %p87 = scmp.eq.s32.totalorder %s39, 1
      %p88 = por %p86, %p87
      %p90 = scmp.ne.s32.totalorder %s73, %s89
      %p91 = scmp.eq.s32.totalorder %s39, 0
      %p92 = por %p90, %p91
      %s94 = sadd.s32 %s93, 1
      %p97 = scmp.eq.s32.totalorder %s33, 1
      %p98 = scmp.ne.s32.totalorder %s93, %s95
      %p99 = scmp.eq.s32.totalorder %s33, 0
      %p100 = por %p98, %p99
      %p101 = scmp.ne.s32.totalorder %s93, %s95
      %p102 = scmp.eq.s32.totalorder %s38, 1
      %p103 = por %p101, %p102
      %p104 = scmp.ne.s32.totalorder %s95, %s96
      %p105 = scmp.eq.s32.totalorder %s38, 0
      %p106 = por %p104, %p105
      %p107 = scmp.ne.s32.totalorder %s95, %s96
      %p108 = scmp.eq.s32.totalorder %s39, 1
      %p109 = por %p107, %p108
      %p111 = scmp.ne.s32.totalorder %s96, %s110
      %p112 = scmp.eq.s32.totalorder %s39, 0
      %p113 = por %p111, %p112
      %s115 = sadd.s32 %s114, 1
      %p118 = scmp.eq.s32.totalorder %s33, 1
      %p119 = scmp.ne.s32.totalorder %s114, %s116
      %p120 = scmp.eq.s32.totalorder %s33, 0
      %p121 = por %p119, %p120
      %p122 = scmp.ne.s32.totalorder %s114, %s116
      %p123 = scmp.eq.s32.totalorder %s38, 1
      %p124 = por %p122, %p123
      %p125 = scmp.ne.s32.totalorder %s116, %s117
      %p126 = scmp.eq.s32.totalorder %s38, 0
      %p127 = por %p125, %p126
      %p128 = scmp.ne.s32.totalorder %s116, %s117
      %p129 = scmp.eq.s32.totalorder %s39, 1
      %p130 = por %p128, %p129
      %p132 = scmp.ne.s32.totalorder %s117, %s131
      %p133 = scmp.eq.s32.totalorder %s39, 0
      %p134 = por %p132, %p133
      %s136 = sadd.s32 %s135, 1
      %p139 = scmp.eq.s32.totalorder %s33, 1
      %p140 = scmp.ne.s32.totalorder %s135, %s137
      %p141 = scmp.eq.s32.totalorder %s33, 0
      %p142 = por %p140, %p141
      %p143 = scmp.ne.s32.totalorder %s135, %s137
      %p144 = scmp.eq.s32.totalorder %s38, 1
      %p145 = por %p143, %p144
      %p146 = scmp.ne.s32.totalorder %s137, %s138
      %p147 = scmp.eq.s32.totalorder %s38, 0
      %p148 = por %p146, %p147
      %p149 = scmp.ne.s32.totalorder %s137, %s138
      %p150 = scmp.eq.s32.totalorder %s39, 1
      %p151 = por %p149, %p150
      %p153 = scmp.ne.s32.totalorder %s138, %s152
      %p154 = scmp.eq.s32.totalorder %s39, 0
      %p155 = por %p153, %p154
      %s157 = sadd.s32 %s156, 1
      %p160 = scmp.eq.s32.totalorder %s33, 1
      %p161 = scmp.ne.s32.totalorder %s156, %s158
      %p162 = scmp.eq.s32.totalorder %s33, 0
      %p163 = por %p161, %p162
      %p164 = scmp.ne.s32.totalorder %s156, %s158
      %p165 = scmp.eq.s32.totalorder %s38, 1
      %p166 = por %p164, %p165
      %p167 = scmp.ne.s32.totalorder %s158, %s159
      %p168 = scmp.eq.s32.totalorder %s38, 0
      %p169 = por %p167, %p168
      %p170 = scmp.ne.s32.totalorder %s158, %s159
      %p171 = scmp.eq.s32.totalorder %s39, 1
      %p172 = por %p170, %p171
      %p174 = scmp.ne.s32.totalorder %s159, %s173
      %p175 = scmp.eq.s32.totalorder %s39, 0
      %p176 = por %p174, %p175
      %s178 = sadd.s32 %s177, 1
      %p181 = scmp.eq.s32.totalorder %s33, 1
      %p182 = scmp.ne.s32.totalorder %s177, %s179
      %p183 = scmp.eq.s32.totalorder %s33, 0
      %p184 = por %p182, %p183
      %p185 = scmp.ne.s32.totalorder %s177, %s179
      %p186 = scmp.eq.s32.totalorder %s38, 1
      %p187 = por %p185, %p186
      %p188 = scmp.ne.s32.totalorder %s179, %s180
      %p189 = scmp.eq.s32.totalorder %s38, 0
      %p190 = por %p188, %p189
      %p191 = scmp.ne.s32.totalorder %s179, %s180
      %p192 = scmp.eq.s32.totalorder %s39, 1
      %p193 = por %p191, %p192
      %p195 = scmp.ne.s32.totalorder %s180, %s194
      %p196 = scmp.eq.s32.totalorder %s39, 0
      %p197 = por %p195, %p196
      %s199 = sadd.s32 %s198, 1
      %p202 = scmp.eq.s32.totalorder %s33, 1
      %p203 = scmp.ne.s32.totalorder %s198, %s200
      %p204 = scmp.eq.s32.totalorder %s33, 0
      %p205 = por %p203, %p204
      %p206 = scmp.ne.s32.totalorder %s198, %s200
      %p207 = scmp.eq.s32.totalorder %s38, 1
      %p208 = por %p206, %p207
      %p209 = scmp.ne.s32.totalorder %s200, %s201
      %p210 = scmp.eq.s32.totalorder %s38, 0
      %p211 = por %p209, %p210
      %p212 = scmp.ne.s32.totalorder %s200, %s201
      %p213 = scmp.eq.s32.totalorder %s39, 1
      %p214 = por %p212, %p213
      %p216 = scmp.ne.s32.totalorder %s201, %s215
      %p217 = scmp.eq.s32.totalorder %s39, 0
      %p218 = por %p216, %p217
      %s220 = sadd.s32 %s219, 1
      %p223 = scmp.eq.s32.totalorder %s33, 1
      %p224 = scmp.ne.s32.totalorder %s219, %s221
      %p225 = scmp.eq.s32.totalorder %s33, 0
      %p226 = por %p224, %p225
      %p227 = scmp.ne.s32.totalorder %s219, %s221
      %p228 = scmp.eq.s32.totalorder %s38, 1
      %p229 = por %p227, %p228
      %p230 = scmp.ne.s32.totalorder %s221, %s222
      %p231 = scmp.eq.s32.totalorder %s38, 0
      %p232 = por %p230, %p231
      %p233 = scmp.ne.s32.totalorder %s221, %s222
      %p234 = scmp.eq.s32.totalorder %s39, 1
      %p235 = por %p233, %p234
      %p237 = scmp.ne.s32.totalorder %s222, %s236
      %p238 = scmp.eq.s32.totalorder %s39, 0
      %p239 = por %p237, %p238
      %s241 = sadd.s32 %s240, 1
      %p244 = scmp.eq.s32.totalorder %s33, 1
      %p245 = scmp.ne.s32.totalorder %s240, %s242
      %p246 = scmp.eq.s32.totalorder %s33, 0
      %p247 = por %p245, %p246
      %p248 = scmp.ne.s32.totalorder %s240, %s242
      %p249 = scmp.eq.s32.totalorder %s38, 1
      %p250 = por %p248, %p249
      %p251 = scmp.ne.s32.totalorder %s242, %s243
      %p252 = scmp.eq.s32.totalorder %s38, 0
      %p253 = por %p251, %p252
      %p254 = scmp.ne.s32.totalorder %s242, %s243
      %p255 = scmp.eq.s32.totalorder %s39, 1
      %p256 = por %p254, %p255
      %p258 = scmp.ne.s32.totalorder %s243, %s257
      %p259 = scmp.eq.s32.totalorder %s39, 0
      %p260 = por %p258, %p259
      %s262 = sadd.s32 %s261, 1
      %p265 = scmp.eq.s32.totalorder %s33, 1
      %p266 = scmp.ne.s32.totalorder %s261, %s263
      %p267 = scmp.eq.s32.totalorder %s33, 0
      %p268 = por %p266, %p267
      %p269 = scmp.ne.s32.totalorder %s261, %s263
      %p270 = scmp.eq.s32.totalorder %s38, 1
      %p271 = por %p269, %p270
      %p272 = scmp.ne.s32.totalorder %s263, %s264
      %p273 = scmp.eq.s32.totalorder %s38, 0
      %p274 = por %p272, %p273
      %p275 = scmp.ne.s32.totalorder %s263, %s264
      %p276 = scmp.eq.s32.totalorder %s39, 1
      %p277 = por %p275, %p276
      %p279 = scmp.ne.s32.totalorder %s264, %s278
      %p280 = scmp.eq.s32.totalorder %s39, 0
      %p281 = por %p279, %p280
      %s283 = sadd.s32 %s282, 1
      %p286 = scmp.eq.s32.totalorder %s33, 1
      %p287 = scmp.ne.s32.totalorder %s282, %s284
      %p288 = scmp.eq.s32.totalorder %s33, 0
      %p289 = por %p287, %p288
      %p290 = scmp.ne.s32.totalorder %s282, %s284
      %p291 = scmp.eq.s32.totalorder %s38, 1
      %p292 = por %p290, %p291
      %p293 = scmp.ne.s32.totalorder %s284, %s285
      %p294 = scmp.eq.s32.totalorder %s38, 0
      %p295 = por %p293, %p294
      %p296 = scmp.ne.s32.totalorder %s284, %s285
      %p297 = scmp.eq.s32.totalorder %s39, 1
      %p298 = por %p296, %p297
      %p300 = scmp.ne.s32.totalorder %s285, %s299
      %p301 = scmp.eq.s32.totalorder %s39, 0
      %p302 = por %p300, %p301
      %s304 = sadd.s32 %s303, 1
      %p307 = scmp.eq.s32.totalorder %s33, 1
      %p308 = scmp.ne.s32.totalorder %s303, %s305
      %p309 = scmp.eq.s32.totalorder %s33, 0
      %p310 = por %p308, %p309
      %p311 = scmp.ne.s32.totalorder %s303, %s305
      %p312 = scmp.eq.s32.totalorder %s38, 1
      %p313 = por %p311, %p312
      %p314 = scmp.ne.s32.totalorder %s305, %s306
      %p315 = scmp.eq.s32.totalorder %s38, 0
      %p316 = por %p314, %p315
      %p317 = scmp.ne.s32.totalorder %s305, %s306
      %p318 = scmp.eq.s32.totalorder %s39, 1
      %p319 = por %p317, %p318
      %p321 = scmp.ne.s32.totalorder %s306, %s320
      %p322 = scmp.eq.s32.totalorder %s39, 0
      %p323 = por %p321, %p322
      %s325 = sadd.s32 %s324, 1
      %p328 = scmp.eq.s32.totalorder %s33, 1
      %p329 = scmp.ne.s32.totalorder %s324, %s326
      %p330 = scmp.eq.s32.totalorder %s33, 0
      %p331 = por %p329, %p330
      %p332 = scmp.ne.s32.totalorder %s324, %s326
      %p333 = scmp.eq.s32.totalorder %s38, 1
      %p334 = por %p332, %p333
      %p335 = scmp.ne.s32.totalorder %s326, %s327
      %p336 = scmp.eq.s32.totalorder %s38, 0
      %p337 = por %p335, %p336
      %p338 = scmp.ne.s32.totalorder %s326, %s327
      %p339 = scmp.eq.s32.totalorder %s39, 1
      %p340 = por %p338, %p339
      %p342 = scmp.ne.s32.totalorder %s327, %s341
      %p343 = scmp.eq.s32.totalorder %s39, 0
      %p344 = por %p342, %p343
      %s346 = sadd.s32 %s345, 1
      %p349 = scmp.eq.s32.totalorder %s33, 1
      %p350 = scmp.ne.s32.totalorder %s345, %s347
      %p351 = scmp.eq.s32.totalorder %s33, 0
      %p352 = por %p350, %p351
      %p353 = scmp.ne.s32.totalorder %s345, %s347
      %p354 = scmp.eq.s32.totalorder %s38, 1
      %p355 = por %p353, %p354
      %p356 = scmp.ne.s32.totalorder %s347, %s348
      %p357 = scmp.eq.s32.totalorder %s38, 0
      %p358 = por %p356, %p357
      %p359 = scmp.ne.s32.totalorder %s347, %s348
      %p360 = scmp.eq.s32.totalorder %s39, 1
      %p361 = por %p359, %p360
      %p363 = scmp.ne.s32.totalorder %s348, %s362
      %p364 = scmp.eq.s32.totalorder %s39, 0
      %p365 = por %p363, %p364
      %s366 = ssub.s32 %s33, %s40
      %p367 = scmp.eq.s32.totalorder %s366, 0
      %s369 = sadd.s32 %s368, 1
      %s370 = scalar_select %p367, %s368, %s369
      %p373 = pneg %p367
      %p374 = scmp.eq.s32.totalorder %s33, 1
      %p375 = por %p373, %p374
      %p376 = scmp.ne.s32.totalorder %s368, %s371
      %p377 = scmp.eq.s32.totalorder %s33, 0
      %p378 = por %p376, %p377
      %p379 = scmp.ne.s32.totalorder %s368, %s371
      %p380 = scmp.eq.s32.totalorder %s38, 1
      %p381 = por %p379, %p380
      %p382 = scmp.ne.s32.totalorder %s371, %s372
      %p383 = scmp.eq.s32.totalorder %s38, 0
      %p384 = por %p382, %p383
      %p385 = scmp.ne.s32.totalorder %s371, %s372
      %p386 = scmp.eq.s32.totalorder %s39, 1
      %p387 = por %p385, %p386
      %p389 = scmp.ne.s32.totalorder %s372, %s388
      %p390 = scmp.eq.s32.totalorder %s39, 0
      %p391 = por %p389, %p390
      %p392 = scmp.le.s32.totalorder 1, %s33
      %p393 = scmp.lt.s32.totalorder %s33, 3
      %p394 = pnand %p392, %p393
      %p395 = pneg %p394
      // Predicated region
      $region9: #{tpu_custom_call.1} parent=5 // pred_check
        _
      $region10: #{tpu_custom_call.1} parent=5 // pred_check_branch
        %397 = sbr.rel (%p394) target = $region12
      $region11: #{tpu_custom_call.1} parent=5 // pred_region
        %s398 = ssub.s32 %s33, 1
        // Predicated region
        $region13: #{tpu_custom_call.1} parent=11 // pred_check
          %p399 = pneg %p106
        $region14: #{tpu_custom_call.1} parent=11 // pred_check_branch
          %401 = sbr.rel (%p399) target = $region16
        $region15: #{tpu_custom_call.1} parent=11 // pred_region
          %s403 = ssub.s32 2048, 2048
          %404 = vsyncadd [#allocation6], %s403
          %s405 = sshll.u32 [#allocation7], 4
          %s406 = int_to_ptr.vmem [resolvable:$true] %s405
          %411 = dma.hbm_to_vmem [thread:$0]  %s2, 2048, %s406, [#allocation6], 128, 128, 8
        $region16: #{tpu_custom_call.1} parent=11 // pred_fallthru
          _
        // Predicated region
        $region17: #{tpu_custom_call.1} parent=11 // pred_check
          %p412 = pneg %p127
        $region18: #{tpu_custom_call.1} parent=11 // pred_check_branch
          %414 = sbr.rel (%p412) target = $region20
        $region19: #{tpu_custom_call.1} parent=11 // pred_region
          _
        $region20: #{tpu_custom_call.1} parent=11 // pred_fallthru
          _
        // Predicated region
        $region21: #{tpu_custom_call.1} parent=11 // pred_check
          %p415 = pneg %p148
        $region22: #{tpu_custom_call.1} parent=11 // pred_check_branch
          %417 = sbr.rel (%p415) target = $region24
        $region23: #{tpu_custom_call.1} parent=11 // pred_region
          _
        $region24: #{tpu_custom_call.1} parent=11 // pred_fallthru
          _
        // Predicated region
        $region25: #{tpu_custom_call.1} parent=11 // pred_check
          %p418 = pneg %p169
        $region26: #{tpu_custom_call.1} parent=11 // pred_check_branch
          %420 = sbr.rel (%p418) target = $region28
        $region27: #{tpu_custom_call.1} parent=11 // pred_region
          _
        $region28: #{tpu_custom_call.1} parent=11 // pred_fallthru
          _
        // Predicated region
        $region29: #{tpu_custom_call.1} parent=11 // pred_check
          %p421 = pneg %p190
        $region30: #{tpu_custom_call.1} parent=11 // pred_check_branch
          %423 = sbr.rel (%p421) target = $region32
        $region31: #{tpu_custom_call.1} parent=11 // pred_region
          %s425 = ssub.s32 4096, 4096
          %426 = vsyncadd [#allocation9], %s425
          %s427 = sshll.u32 [#allocation8], 4
          %s428 = int_to_ptr.vmem [resolvable:$true] %s427
          %433 = dma.hbm_to_vmem [thread:$0]  %s6, 4096, %s428, [#allocation9], 128, 128, 8
        $region32: #{tpu_custom_call.1} parent=11 // pred_fallthru
          _
        // Predicated region
        $region33: #{tpu_custom_call.1} parent=11 // pred_check
          %p434 = pneg %p211
        $region34: #{tpu_custom_call.1} parent=11 // pred_check_branch
          %436 = sbr.rel (%p434) target = $region36
        $region35: #{tpu_custom_call.1} parent=11 // pred_region
          _
        $region36: #{tpu_custom_call.1} parent=11 // pred_fallthru
          _
        // Predicated region
        $region37: #{tpu_custom_call.1} parent=11 // pred_check
          %p437 = pneg %p232
        $region38: #{tpu_custom_call.1} parent=11 // pred_check_branch
          %439 = sbr.rel (%p437) target = $region40
        $region39: #{tpu_custom_call.1} parent=11 // pred_region
          %s441 = ssub.s32 6144, 6144
          %442 = vsyncadd [#allocation9], %s441
          %s443 = sshll.u32 [#allocation10], 4
          %s444 = int_to_ptr.vmem [resolvable:$true] %s443
          %449 = dma.hbm_to_vmem [thread:$0]  %s8, 6144, %s444, [#allocation9], 192, 192, 12
        $region40: #{tpu_custom_call.1} parent=11 // pred_fallthru
          _
        // Predicated region
        $region41: #{tpu_custom_call.1} parent=11 // pred_check
          %p450 = pneg %p253
        $region42: #{tpu_custom_call.1} parent=11 // pred_check_branch
          %452 = sbr.rel (%p450) target = $region44
        $region43: #{tpu_custom_call.1} parent=11 // pred_region
          %s454 = ssub.s32 6144, 6144
          %455 = vsyncadd [#allocation12], %s454
          %s456 = sshll.u32 [#allocation11], 4
          %s457 = int_to_ptr.vmem [resolvable:$true] %s456
          %462 = dma.hbm_to_vmem [thread:$0]  %s9, 6144, %s457, [#allocation12], 192, 192, 12
        $region44: #{tpu_custom_call.1} parent=11 // pred_fallthru
          _
        // Predicated region
        $region45: #{tpu_custom_call.1} parent=11 // pred_check
          %p463 = pneg %p274
        $region46: #{tpu_custom_call.1} parent=11 // pred_check_branch
          %465 = sbr.rel (%p463) target = $region48
        $region47: #{tpu_custom_call.1} parent=11 // pred_region
          _
        $region48: #{tpu_custom_call.1} parent=11 // pred_fallthru
          _
        // Predicated region
        $region49: #{tpu_custom_call.1} parent=11 // pred_check
          %p466 = pneg %p295
        $region50: #{tpu_custom_call.1} parent=11 // pred_check_branch
          %468 = sbr.rel (%p466) target = $region52
        $region51: #{tpu_custom_call.1} parent=11 // pred_region
          %s470 = ssub.s32 2048, 2048
          %471 = vsyncadd [#allocation12], %s470
          %s472 = sshll.u32 [#allocation13], 4
          %s473 = int_to_ptr.vmem [resolvable:$true] %s472
          %478 = dma.hbm_to_vmem [thread:$0]  %s11, 2048, %s473, [#allocation12], 64, 64, 4
        $region52: #{tpu_custom_call.1} parent=11 // pred_fallthru
          _
        // Predicated region
        $region53: #{tpu_custom_call.1} parent=11 // pred_check
          %p479 = pneg %p316
        $region54: #{tpu_custom_call.1} parent=11 // pred_check_branch
          %481 = sbr.rel (%p479) target = $region56
        $region55: #{tpu_custom_call.1} parent=11 // pred_region
          _
        $region56: #{tpu_custom_call.1} parent=11 // pred_fallthru
          _
        // Predicated region
        $region57: #{tpu_custom_call.1} parent=11 // pred_check
          %p482 = pneg %p337
        $region58: #{tpu_custom_call.1} parent=11 // pred_check_branch
          %484 = sbr.rel (%p482) target = $region60
        $region59: #{tpu_custom_call.1} parent=11 // pred_region
          %s486 = ssub.s32 1024, 1024
          %487 = vsyncadd [#allocation15], %s486
          %s488 = sshll.u32 [#allocation14], 4
          %s489 = int_to_ptr.vmem [resolvable:$true] %s488
          %494 = dma.hbm_to_vmem [thread:$0]  %s13, 1024, %s489, [#allocation15], 64, 64, 4
        $region60: #{tpu_custom_call.1} parent=11 // pred_fallthru
          _
        // Predicated region
        $region61: #{tpu_custom_call.1} parent=11 // pred_check
          %p495 = pneg %p358
        $region62: #{tpu_custom_call.1} parent=11 // pred_check_branch
          %497 = sbr.rel (%p495) target = $region64
        $region63: #{tpu_custom_call.1} parent=11 // pred_region
          _
        $region64: #{tpu_custom_call.1} parent=11 // pred_fallthru
          _
      $region12: #{tpu_custom_call.1} parent=5 // pred_fallthru
        _
      %p498 = scmp.lt.s32.totalorder %s33, 2
      // Predicated region
      $region65: #{tpu_custom_call.1} parent=5 // pred_check
        %p499 = pneg %p498
      $region66: #{tpu_custom_call.1} parent=5 // pred_check_branch
        %501 = sbr.rel (%p499) target = $region68
      $region67: #{tpu_custom_call.1} parent=5 // pred_region
        // Predicated region
        $region69: #{tpu_custom_call.1} parent=67 // pred_check
          %p502 = pneg %p53
        $region70: #{tpu_custom_call.1} parent=67 // pred_check_branch
          %504 = sbr.rel (%p502) target = $region72
        $region71: #{tpu_custom_call.1} parent=67 // pred_region
          %s505 = sand.u32 %s43, 1
          %s506 = scalar_lea.sflag [#allocation3], %s505
          %s507 = sand.u32 %s43, 1
          %s508 = smul.addr %s507, 16
          %s509 = scalar_lea.vmem [#allocation2], %s508
          %s511 = ssub.s32 256, 256
          %512 = vsyncadd %s506, %s511
          %s513 = smul.addr %s33, 2
          %s514 = smul.addr %s513, 128
          %s515 = scalar_lea.hbm %s0, %s514
          %s517 = sshll.u32 %s509, 4
          %s518 = int_to_ptr.vmem [resolvable:$true] %s517
          %520 = dma.hbm_to_vmem [thread:$0]  %s515, 256, %s518, %s506
        $region72: #{tpu_custom_call.1} parent=67 // pred_fallthru
          _
        // Predicated region
        $region73: #{tpu_custom_call.1} parent=67 // pred_check
          %p521 = pneg %p79
        $region74: #{tpu_custom_call.1} parent=67 // pred_check_branch
          %523 = sbr.rel (%p521) target = $region76
        $region75: #{tpu_custom_call.1} parent=67 // pred_region
          %s524 = sand.u32 %s33, 1
          %s525 = scalar_lea.sflag [#allocation6], %s524
          %s526 = sand.u32 %s69, 1
          %s527 = smul.addr %s526, 8
          %s528 = scalar_lea.vmem [#allocation5], %s527
          %s530 = ssub.s32 128, 128
          %531 = vsyncadd %s525, %s530
          %s532 = smul.addr %s33, 128
          %s533 = scalar_lea.hbm %s1, %s532
          %s535 = sshll.u32 %s528, 4
          %s536 = int_to_ptr.vmem [resolvable:$true] %s535
          %538 = dma.hbm_to_vmem [thread:$0]  %s533, 128, %s536, %s525
        $region76: #{tpu_custom_call.1} parent=67 // pred_fallthru
          _
      $region68: #{tpu_custom_call.1} parent=5 // pred_fallthru
        _
      %p539 = scmp.le.s32.totalorder 1, %s33
      %p540 = scmp.lt.s32.totalorder %s33, 3
      %p541 = pnand %p539, %p540
      %p542 = pneg %p541
      // Predicated region
      $region77: #{tpu_custom_call.1} parent=5 // pred_check
        _
      $region78: #{tpu_custom_call.1} parent=5 // pred_check_branch
        %544 = sbr.rel (%p541) target = $region80
      $region79: #{tpu_custom_call.1} parent=5 // pred_region
        %s545 = ssub.s32 %s33, 1
        %s546 = sand.u32 %s46, 1
        %s547 = scalar_lea.sflag [#allocation3], %s546
        %s548 = sand.u32 %s46, 1
        %s549 = smul.addr %s548, 16
        %s550 = scalar_lea.vmem [#allocation2], %s549
        // Predicated region
        $region81: #{tpu_custom_call.1} parent=79 // pred_check
          %p551 = pneg %p59
        $region82: #{tpu_custom_call.1} parent=79 // pred_check_branch
          %553 = sbr.rel (%p551) target = $region84
        $region83: #{tpu_custom_call.1} parent=79 // pred_region
          %554 = dma.done %s547, 256
        $region84: #{tpu_custom_call.1} parent=79 // pred_fallthru
          _
        %s555 = sand.u32 %s38, 1
        %s556 = scalar_lea.sflag [#allocation6], %s555
        %s557 = sand.u32 %s72, 1
        %s558 = smul.addr %s557, 8
        %s559 = scalar_lea.vmem [#allocation5], %s558
        // Predicated region
        $region85: #{tpu_custom_call.1} parent=79 // pred_check
          %p560 = pneg %p85
        $region86: #{tpu_custom_call.1} parent=79 // pred_check_branch
          %562 = sbr.rel (%p560) target = $region88
        $region87: #{tpu_custom_call.1} parent=79 // pred_region
          %563 = dma.done %s556, 128
        $region88: #{tpu_custom_call.1} parent=79 // pred_fallthru
          _
        // Predicated region
        $region89: #{tpu_custom_call.1} parent=79 // pred_check
          %p564 = pneg %p106
        $region90: #{tpu_custom_call.1} parent=79 // pred_check_branch
          %566 = sbr.rel (%p564) target = $region92
        $region91: #{tpu_custom_call.1} parent=79 // pred_region
          %567 = dma.done [#allocation6], 2048
        $region92: #{tpu_custom_call.1} parent=79 // pred_fallthru
          _
        // Predicated region
        $region93: #{tpu_custom_call.1} parent=79 // pred_check
          %p568 = pneg %p190
        $region94: #{tpu_custom_call.1} parent=79 // pred_check_branch
          %570 = sbr.rel (%p568) target = $region96
        $region95: #{tpu_custom_call.1} parent=79 // pred_region
          %571 = dma.done [#allocation9], 4096
        $region96: #{tpu_custom_call.1} parent=79 // pred_fallthru
          _
        // Predicated region
        $region97: #{tpu_custom_call.1} parent=79 // pred_check
          %p572 = pneg %p232
        $region98: #{tpu_custom_call.1} parent=79 // pred_check_branch
          %574 = sbr.rel (%p572) target = $region100
        $region99: #{tpu_custom_call.1} parent=79 // pred_region
          %575 = dma.done [#allocation9], 6144
        $region100: #{tpu_custom_call.1} parent=79 // pred_fallthru
          _
        // Predicated region
        $region101: #{tpu_custom_call.1} parent=79 // pred_check
          %p576 = pneg %p253
        $region102: #{tpu_custom_call.1} parent=79 // pred_check_branch
          %578 = sbr.rel (%p576) target = $region104
        $region103: #{tpu_custom_call.1} parent=79 // pred_region
          %579 = dma.done [#allocation12], 6144
        $region104: #{tpu_custom_call.1} parent=79 // pred_fallthru
          _
        // Predicated region
        $region105: #{tpu_custom_call.1} parent=79 // pred_check
          %p580 = pneg %p295
        $region106: #{tpu_custom_call.1} parent=79 // pred_check_branch
          %582 = sbr.rel (%p580) target = $region108
        $region107: #{tpu_custom_call.1} parent=79 // pred_region
          %583 = dma.done [#allocation12], 2048
        $region108: #{tpu_custom_call.1} parent=79 // pred_fallthru
          _
        // Predicated region
        $region109: #{tpu_custom_call.1} parent=79 // pred_check
          %p584 = pneg %p337
        $region110: #{tpu_custom_call.1} parent=79 // pred_check_branch
          %586 = sbr.rel (%p584) target = $region112
        $region111: #{tpu_custom_call.1} parent=79 // pred_region
          %587 = dma.done [#allocation15], 1024
        $region112: #{tpu_custom_call.1} parent=79 // pred_fallthru
          _
        %s588 = sand.u32 %s46, 1
        %s589 = scalar_lea.sflag [#allocation3], %s588
        %s590 = sand.u32 %s46, 1
        %s591 = smul.addr %s590, 16
        %s592 = scalar_lea.vmem [#allocation2], %s591
        %p593 = pneg %p59
        %p594 = pneg %p56
        %s595 = sand.u32 %s38, 1
        %s596 = scalar_lea.sflag [#allocation6], %s595
        %s597 = sand.u32 %s72, 1
        %s598 = smul.addr %s597, 8
        %s599 = scalar_lea.vmem [#allocation5], %s598
        %p600 = pneg %p85
        %p601 = pneg %p82
        %p602 = pneg %p106
        %p603 = pneg %p103
        %p604 = pneg %p127
        %p605 = pneg %p124
        %p606 = pneg %p148
        %p607 = pneg %p145
        %p608 = pneg %p169
        %p609 = pneg %p166
        %p610 = pneg %p190
        %p611 = pneg %p187
        %p612 = pneg %p211
        %p613 = pneg %p208
        %p614 = pneg %p232
        %p615 = pneg %p229
        %p616 = pneg %p253
        %p617 = pneg %p250
        %p618 = pneg %p274
        %p619 = pneg %p271
        %p620 = pneg %p295
        %p621 = pneg %p292
        %p622 = pneg %p316
        %p623 = pneg %p313
        %p624 = pneg %p337
        %p625 = pneg %p334
        %p626 = pneg %p358
        %p627 = pneg %p355
        %p628 = pneg %p384
        %p629 = pneg %p381
        %s630 = sand.u32 %s371, 1
        %s631 = scalar_lea.sflag [#allocation4], %s630
        %s632 = sand.u32 %s371, 1
        %s633 = smul.addr %s632, 8
        %s634 = scalar_lea.vmem [#allocation16], %s633
        %v636 = vld [vmem:[%s550] sm:$0xff]
        %v637 = vld [vmem:[%s550 + $0x8] sm:$0xff]
        %v638 = vpack.c.bf16 %v636, %v636
        %v639 = vpack.c.bf16 %v637, %v637
        %v640 = vld [vmem:[%s559] sm:$0xff]
        %v641 = vpack.c.bf16 %v640, %v640
        %v642 = vld [vmem:[#allocation7] sm:$0xff]
        %v643 = vld [vmem:[#allocation7 + $0x8] sm:$0xff]
        %v644 = vld [vmem:[#allocation7 + $0x10] sm:$0xff]
        %v645 = vld [vmem:[#allocation7 + $0x18] sm:$0xff]
        %v646 = vld [vmem:[#allocation7 + $0x20] sm:$0xff]
        %v647 = vld [vmem:[#allocation7 + $0x28] sm:$0xff]
        %v648 = vld [vmem:[#allocation7 + $0x30] sm:$0xff]
        %v649 = vld [vmem:[#allocation7 + $0x38] sm:$0xff]
        %v650 = vld [vmem:[#allocation7 + $0x40] sm:$0xff]
        %v651 = vld [vmem:[#allocation7 + $0x48] sm:$0xff]
        %v652 = vld [vmem:[#allocation7 + $0x50] sm:$0xff]
        %v653 = vld [vmem:[#allocation7 + $0x58] sm:$0xff]
        %v654 = vld [vmem:[#allocation7 + $0x60] sm:$0xff]
        %v655 = vld [vmem:[#allocation7 + $0x68] sm:$0xff]
        %v656 = vld [vmem:[#allocation7 + $0x70] sm:$0xff]
        %v657 = vld [vmem:[#allocation7 + $0x78] sm:$0xff]
        %v658 = vld [vmem:[%s3] sm:$0x3]
        %v660 = vlaneseq
        %v661 = vshrl.u32 %v660, 7
        %v662 = vsub.s32 0, %v661
        %v663 = vrot.slane %v658, %v662
        %v664 = vlaneseq
        %v665 = vshrl.u32 %v664, 7
        %v666 = vsub.s32 1, %v665
        %v667 = vrot.slane %v658, %v666
        %v686 = vunpack.c.l.b16 %v642
        %v687 = vunpack.c.h.b16 %v642
        %v688 = vunpack.c.l.b16 %v643
        %v689 = vunpack.c.h.b16 %v643
        %v690 = vunpack.c.l.b16 %v644
        %v691 = vunpack.c.h.b16 %v644
        %v692 = vunpack.c.l.b16 %v645
        %v693 = vunpack.c.h.b16 %v645
        %v694 = vunpack.c.l.b16 %v646
        %v695 = vunpack.c.h.b16 %v646
        %v696 = vunpack.c.l.b16 %v647
        %v697 = vunpack.c.h.b16 %v647
        %v698 = vunpack.c.l.b16 %v648
        %v699 = vunpack.c.h.b16 %v648
        %v700 = vunpack.c.l.b16 %v649
        %v701 = vunpack.c.h.b16 %v649
        %v702 = vunpack.c.l.b16 %v650
        %v703 = vunpack.c.h.b16 %v650
        %v704 = vunpack.c.l.b16 %v651
        %v705 = vunpack.c.h.b16 %v651
        %v706 = vunpack.c.l.b16 %v652
        %v707 = vunpack.c.h.b16 %v652
        %v708 = vunpack.c.l.b16 %v653
        %v709 = vunpack.c.h.b16 %v653
        %v710 = vunpack.c.l.b16 %v654
        %v711 = vunpack.c.h.b16 %v654
        %v712 = vunpack.c.l.b16 %v655
        %v713 = vunpack.c.h.b16 %v655
        %v714 = vunpack.c.l.b16 %v656
        %v715 = vunpack.c.h.b16 %v656
        %v716 = vunpack.c.l.b16 %v657
        %v717 = vunpack.c.h.b16 %v657
        %v718 = vpack.c.b16 %v688, %v686
        %v719 = vpack.c.b16 %v689, %v687
        %v720 = vpack.c.b16 %v692, %v690
        %v721 = vpack.c.b16 %v693, %v691
        %v722 = vpack.c.b16 %v696, %v694
        %v723 = vpack.c.b16 %v697, %v695
        %v724 = vpack.c.b16 %v700, %v698
        %v725 = vpack.c.b16 %v701, %v699
        %v726 = vpack.c.b16 %v704, %v702
        %v727 = vpack.c.b16 %v705, %v703
        %v728 = vpack.c.b16 %v708, %v706
        %v729 = vpack.c.b16 %v709, %v707
        %v730 = vpack.c.b16 %v712, %v710
        %v731 = vpack.c.b16 %v713, %v711
        %v732 = vpack.c.b16 %v716, %v714
        %v733 = vpack.c.b16 %v717, %v715
        %750 = vmatprep.subr.bf16.mxu0 %v733
        %751 = vmatpush1.bf16.msra.mxu0 %v732
        %752 = vmatprep.subr.bf16.mxu0 %v731
        %753 = vmatpush1.bf16.msra.mxu0 %v730
        %754 = vmatprep.subr.bf16.mxu0 %v729
        %755 = vmatpush1.bf16.msra.mxu0 %v728
        %756 = vmatprep.subr.bf16.mxu0 %v727
        %757 = vmatpush1.bf16.msra.mxu0 %v726
        %758 = vmatprep.subr.bf16.mxu0 %v725
        %759 = vmatpush1.bf16.msra.mxu0 %v724
        %760 = vmatprep.subr.bf16.mxu0 %v723
        %761 = vmatpush1.bf16.msra.mxu0 %v722
        %762 = vmatprep.subr.bf16.mxu0 %v721
        %763 = vmatpush1.bf16.msra.mxu0 %v720
        %764 = vmatprep.subr.bf16.mxu0 %v719
        %765 = vmatpush1.bf16.msra.mxu0 %v718
        %766 = vmatprep.subr.bf16.mxu0 0
        %767 = vmatpush2.bf16.msra.mxu0 0
        %768 = vmatprep.subr.bf16.mxu0 0
        %769 = vmatpush2.bf16.msra.mxu0 0
        %770 = vmatprep.subr.bf16.mxu0 0
        %771 = vmatpush2.bf16.msra.mxu0 0
        %772 = vmatprep.subr.bf16.mxu0 0
        %773 = vmatpush2.bf16.msra.mxu0 0
        %774 = vmatprep.subr.bf16.mxu0 0
        %775 = vmatpush2.bf16.msra.mxu0 0
        %776 = vmatprep.subr.bf16.mxu0 0
        %777 = vmatpush2.bf16.msra.mxu0 0
        %778 = vmatprep.subr.bf16.mxu0 0
        %779 = vmatpush2.bf16.msra.mxu0 0
        %780 = vmatprep.subr.bf16.mxu0 0
        %781 = vmatpush2.bf16.msra.mxu0 0
        %782 = vmatprep.mubr.bf16.mxu0 0
        %783 = vmatmul.mubr.bf16.gmra.mxu0 %v641
        %v784 = vpop.f32.mrf.mxu0
        %v785 = vadd.f32 %v663, %v784
        %v786 = vpop.f32.mrf.mxu0
        %v787 = vadd.f32 %v667, %v786
        %v788 = vpop.f32.mrf.mxu0
        %v789 = vpop.f32.mrf.mxu0
        %790 = vdwg.mxu0
        %v791 = vmax.f32 %v785, 0.0
        %v792 = vmax.f32 %v787, 0.0
        %v793 = vadd.f32 %v791, %v792
        %794 = vadd.xlane.f32.xlu0 %v793
        %v795 = vpop.xlane.xlu0 %794
        %v796 = vrcp.pop 256.0
        %v797 = vmul.f32 %v795, %v796
        %v798 = vsub.f32 %v791, %v797
        %v799 = vsub.f32 %v792, %v797
        %v800 = vmul.f32 %v798, %v798
        %v801 = vmul.f32 %v799, %v799
        %v802 = vadd.f32 %v800, %v801
        %803 = vadd.xlane.f32.xlu0 %v802
        %v804 = vpop.xlane.xlu0 %803
        %v805 = vmul.f32 %v804, %v796
        %v806 = vadd.f32 %v805, 1e-05
        %v807 = vrsqrt.pop %v806
        %v808 = vmul.f32 %v798, %v807
        %v809 = vmul.f32 %v799, %v807
        %v810 = vld [vmem:[%s4] sm:$0x3]
        %v812 = vlaneseq
        %v813 = vshrl.u32 %v812, 7
        %v814 = vsub.s32 0, %v813
        %v815 = vrot.slane %v810, %v814
        %v816 = vlaneseq
        %v817 = vshrl.u32 %v816, 7
        %v818 = vsub.s32 1, %v817
        %v819 = vrot.slane %v810, %v818
        %v822 = vmul.f32 %v808, %v815
        %v823 = vmul.f32 %v809, %v819
        %v824 = vld [vmem:[%s5] sm:$0x3]
        %v826 = vlaneseq
        %v827 = vshrl.u32 %v826, 7
        %v828 = vsub.s32 0, %v827
        %v829 = vrot.slane %v824, %v828
        %v830 = vlaneseq
        %v831 = vshrl.u32 %v830, 7
        %v832 = vsub.s32 1, %v831
        %v833 = vrot.slane %v824, %v832
        %v836 = vadd.f32 %v822, %v829
        %v837 = vadd.f32 %v823, %v833
        %v838 = vpack.c.bf16 %v836, %v836
        %v839 = vpack.c.bf16 %v837, %v837
        %v840 = vld [vmem:[#allocation8] sm:$0xff]
        %v841 = vld [vmem:[#allocation8 + $0x8] sm:$0xff]
        %v842 = vld [vmem:[#allocation8 + $0x10] sm:$0xff]
        %v843 = vld [vmem:[#allocation8 + $0x18] sm:$0xff]
        %v844 = vld [vmem:[#allocation8 + $0x20] sm:$0xff]
        %v845 = vld [vmem:[#allocation8 + $0x28] sm:$0xff]
        %v846 = vld [vmem:[#allocation8 + $0x30] sm:$0xff]
        %v847 = vld [vmem:[#allocation8 + $0x38] sm:$0xff]
        %v848 = vld [vmem:[#allocation8 + $0x40] sm:$0xff]
        %v849 = vld [vmem:[#allocation8 + $0x48] sm:$0xff]
        %v850 = vld [vmem:[#allocation8 + $0x50] sm:$0xff]
        %v851 = vld [vmem:[#allocation8 + $0x58] sm:$0xff]
        %v852 = vld [vmem:[#allocation8 + $0x60] sm:$0xff]
        %v853 = vld [vmem:[#allocation8 + $0x68] sm:$0xff]
        %v854 = vld [vmem:[#allocation8 + $0x70] sm:$0xff]
        %v855 = vld [vmem:[#allocation8 + $0x78] sm:$0xff]
        %v856 = vld [vmem:[#allocation8 + $0x80] sm:$0xff]
        %v857 = vld [vmem:[#allocation8 + $0x88] sm:$0xff]
        %v858 = vld [vmem:[#allocation8 + $0x90] sm:$0xff]
        %v859 = vld [vmem:[#allocation8 + $0x98] sm:$0xff]
        %v860 = vld [vmem:[#allocation8 + $0xa0] sm:$0xff]
        %v861 = vld [vmem:[#allocation8 + $0xa8] sm:$0xff]
        %v862 = vld [vmem:[#allocation8 + $0xb0] sm:$0xff]
        %v863 = vld [vmem:[#allocation8 + $0xb8] sm:$0xff]
        %v864 = vld [vmem:[#allocation8 + $0xc0] sm:$0xff]
        %v865 = vld [vmem:[#allocation8 + $0xc8] sm:$0xff]
        %v866 = vld [vmem:[#allocation8 + $0xd0] sm:$0xff]
        %v867 = vld [vmem:[#allocation8 + $0xd8] sm:$0xff]
        %v868 = vld [vmem:[#allocation8 + $0xe0] sm:$0xff]
        %v869 = vld [vmem:[#allocation8 + $0xe8] sm:$0xff]
        %v870 = vld [vmem:[#allocation8 + $0xf0] sm:$0xff]
        %v871 = vld [vmem:[#allocation8 + $0xf8] sm:$0xff]
        %v872 = vld [vmem:[%s7] sm:$0x3]
        %v874 = vlaneseq
        %v875 = vshrl.u32 %v874, 7
        %v876 = vsub.s32 0, %v875
        %v877 = vrot.slane %v872, %v876
        %v878 = vlaneseq
        %v879 = vshrl.u32 %v878, 7
        %v880 = vsub.s32 1, %v879
        %v881 = vrot.slane %v872, %v880
        %v916 = vunpack.c.l.b16 %v840
        %v917 = vunpack.c.h.b16 %v840
        %v918 = vunpack.c.l.b16 %v841
        %v919 = vunpack.c.h.b16 %v841
        %v920 = vunpack.c.l.b16 %v842
        %v921 = vunpack.c.h.b16 %v842
        %v922 = vunpack.c.l.b16 %v843
        %v923 = vunpack.c.h.b16 %v843
        %v924 = vunpack.c.l.b16 %v844
        %v925 = vunpack.c.h.b16 %v844
        %v926 = vunpack.c.l.b16 %v845
        %v927 = vunpack.c.h.b16 %v845
        %v928 = vunpack.c.l.b16 %v846
        %v929 = vunpack.c.h.b16 %v846
        %v930 = vunpack.c.l.b16 %v847
        %v931 = vunpack.c.h.b16 %v847
        %v932 = vunpack.c.l.b16 %v848
        %v933 = vunpack.c.h.b16 %v848
        %v934 = vunpack.c.l.b16 %v849
        %v935 = vunpack.c.h.b16 %v849
        %v936 = vunpack.c.l.b16 %v850
        %v937 = vunpack.c.h.b16 %v850
        %v938 = vunpack.c.l.b16 %v851
        %v939 = vunpack.c.h.b16 %v851
        %v940 = vunpack.c.l.b16 %v852
        %v941 = vunpack.c.h.b16 %v852
        %v942 = vunpack.c.l.b16 %v853
        %v943 = vunpack.c.h.b16 %v853
        %v944 = vunpack.c.l.b16 %v854
        %v945 = vunpack.c.h.b16 %v854
        %v946 = vunpack.c.l.b16 %v855
        %v947 = vunpack.c.h.b16 %v855
        %v948 = vunpack.c.l.b16 %v856
        %v949 = vunpack.c.h.b16 %v856
        %v950 = vunpack.c.l.b16 %v857
        %v951 = vunpack.c.h.b16 %v857
        %v952 = vunpack.c.l.b16 %v858
        %v953 = vunpack.c.h.b16 %v858
        %v954 = vunpack.c.l.b16 %v859
        %v955 = vunpack.c.h.b16 %v859
        %v956 = vunpack.c.l.b16 %v860
        %v957 = vunpack.c.h.b16 %v860
        %v958 = vunpack.c.l.b16 %v861
        %v959 = vunpack.c.h.b16 %v861
        %v960 = vunpack.c.l.b16 %v862
        %v961 = vunpack.c.h.b16 %v862
        %v962 = vunpack.c.l.b16 %v863
        %v963 = vunpack.c.h.b16 %v863
        %v964 = vunpack.c.l.b16 %v864
        %v965 = vunpack.c.h.b16 %v864
        %v966 = vunpack.c.l.b16 %v865
        %v967 = vunpack.c.h.b16 %v865
        %v968 = vunpack.c.l.b16 %v866
        %v969 = vunpack.c.h.b16 %v866
        %v970 = vunpack.c.l.b16 %v867
        %v971 = vunpack.c.h.b16 %v867
        %v972 = vunpack.c.l.b16 %v868
        %v973 = vunpack.c.h.b16 %v868
        %v974 = vunpack.c.l.b16 %v869
        %v975 = vunpack.c.h.b16 %v869
        %v976 = vunpack.c.l.b16 %v870
        %v977 = vunpack.c.h.b16 %v870
        %v978 = vunpack.c.l.b16 %v871
        %v979 = vunpack.c.h.b16 %v871
        %v980 = vpack.c.b16 %v918, %v916
        %v981 = vpack.c.b16 %v919, %v917
        %v982 = vpack.c.b16 %v922, %v920
        %v983 = vpack.c.b16 %v923, %v921
        %v984 = vpack.c.b16 %v926, %v924
        %v985 = vpack.c.b16 %v927, %v925
        %v986 = vpack.c.b16 %v930, %v928
        %v987 = vpack.c.b16 %v931, %v929
        %v988 = vpack.c.b16 %v934, %v932
        %v989 = vpack.c.b16 %v935, %v933
        %v990 = vpack.c.b16 %v938, %v936
        %v991 = vpack.c.b16 %v939, %v937
        %v992 = vpack.c.b16 %v942, %v940
        %v993 = vpack.c.b16 %v943, %v941
        %v994 = vpack.c.b16 %v946, %v944
        %v995 = vpack.c.b16 %v947, %v945
        %v996 = vpack.c.b16 %v950, %v948
        %v997 = vpack.c.b16 %v951, %v949
        %v998 = vpack.c.b16 %v954, %v952
        %v999 = vpack.c.b16 %v955, %v953
        %v1000 = vpack.c.b16 %v958, %v956
        %v1001 = vpack.c.b16 %v959, %v957
        %v1002 = vpack.c.b16 %v962, %v960
        %v1003 = vpack.c.b16 %v963, %v961
        %v1004 = vpack.c.b16 %v966, %v964
        %v1005 = vpack.c.b16 %v967, %v965
        %v1006 = vpack.c.b16 %v970, %v968
        %v1007 = vpack.c.b16 %v971, %v969
        %v1008 = vpack.c.b16 %v974, %v972
        %v1009 = vpack.c.b16 %v975, %v973
        %v1010 = vpack.c.b16 %v978, %v976
        %v1011 = vpack.c.b16 %v979, %v977
        %1044 = vmatprep.subr.bf16.mxu0 %v995
        %1045 = vmatpush1.bf16.msra.mxu0 %v994
        %1046 = vmatprep.subr.bf16.mxu0 %v993
        %1047 = vmatpush1.bf16.msra.mxu0 %v992
        %1048 = vmatprep.subr.bf16.mxu0 %v991
        %1049 = vmatpush1.bf16.msra.mxu0 %v990
        %1050 = vmatprep.subr.bf16.mxu0 %v989
        %1051 = vmatpush1.bf16.msra.mxu0 %v988
        %1052 = vmatprep.subr.bf16.mxu0 %v987
        %1053 = vmatpush1.bf16.msra.mxu0 %v986
        %1054 = vmatprep.subr.bf16.mxu0 %v985
        %1055 = vmatpush1.bf16.msra.mxu0 %v984
        %1056 = vmatprep.subr.bf16.mxu0 %v983
        %1057 = vmatpush1.bf16.msra.mxu0 %v982
        %1058 = vmatprep.subr.bf16.mxu0 %v981
        %1059 = vmatpush1.bf16.msra.mxu0 %v980
        %1060 = vmatprep.subr.bf16.mxu0 %v1011
        %1061 = vmatpush2.bf16.msra.mxu0 %v1010
        %1062 = vmatprep.subr.bf16.mxu0 %v1009
        %1063 = vmatpush2.bf16.msra.mxu0 %v1008
        %1064 = vmatprep.subr.bf16.mxu0 %v1007
        %1065 = vmatpush2.bf16.msra.mxu0 %v1006
        %1066 = vmatprep.subr.bf16.mxu0 %v1005
        %1067 = vmatpush2.bf16.msra.mxu0 %v1004
        %1068 = vmatprep.subr.bf16.mxu0 %v1003
        %1069 = vmatpush2.bf16.msra.mxu0 %v1002
        %1070 = vmatprep.subr.bf16.mxu0 %v1001
        %1071 = vmatpush2.bf16.msra.mxu0 %v1000
        %1072 = vmatprep.subr.bf16.mxu0 %v999
        %1073 = vmatpush2.bf16.msra.mxu0 %v998
        %1074 = vmatprep.subr.bf16.mxu0 %v997
        %1075 = vmatpush2.bf16.msra.mxu0 %v996
        %1076 = vmatprep.mubr.bf16.mxu0 %v839
        %1077 = vmatmul.mubr.bf16.gmra.mxu0 %v838
        %v1078 = vpop.f32.mrf.mxu0
        %v1079 = vadd.f32 %v877, %v1078
        %v1080 = vpop.f32.mrf.mxu0
        %v1081 = vadd.f32 %v881, %v1080
        %v1082 = vpop.f32.mrf.mxu0
        %v1083 = vpop.f32.mrf.mxu0
        %1084 = vdwg.mxu0
        %v1085 = vmax.f32 %v1079, 0.0
        %v1086 = vmax.f32 %v1081, 0.0
        %v1087 = vpack.c.bf16 %v1085, %v1085
        %v1088 = vpack.c.bf16 %v1086, %v1086
        %v1089 = vld [vmem:[#allocation10] sm:$0xff]
        %v1090 = vld [vmem:[#allocation10 + $0x8] sm:$0xf]
        %v1091 = vld [vmem:[#allocation10 + $0xc] sm:$0xff]
        %v1092 = vld [vmem:[#allocation10 + $0x14] sm:$0xf]
        %v1093 = vld [vmem:[#allocation10 + $0x18] sm:$0xff]
        %v1094 = vld [vmem:[#allocation10 + $0x20] sm:$0xf]
        %v1095 = vld [vmem:[#allocation10 + $0x24] sm:$0xff]
        %v1096 = vld [vmem:[#allocation10 + $0x2c] sm:$0xf]
        %v1097 = vld [vmem:[#allocation10 + $0x30] sm:$0xff]
        %v1098 = vld [vmem:[#allocation10 + $0x38] sm:$0xf]
        %v1099 = vld [vmem:[#allocation10 + $0x3c] sm:$0xff]
        %v1100 = vld [vmem:[#allocation10 + $0x44] sm:$0xf]
        %v1101 = vld [vmem:[#allocation10 + $0x48] sm:$0xff]
        %v1102 = vld [vmem:[#allocation10 + $0x50] sm:$0xf]
        %v1103 = vld [vmem:[#allocation10 + $0x54] sm:$0xff]
        %v1104 = vld [vmem:[#allocation10 + $0x5c] sm:$0xf]
        %v1105 = vld [vmem:[#allocation10 + $0x60] sm:$0xff]
        %v1106 = vld [vmem:[#allocation10 + $0x68] sm:$0xf]
        %v1107 = vld [vmem:[#allocation10 + $0x6c] sm:$0xff]
        %v1108 = vld [vmem:[#allocation10 + $0x74] sm:$0xf]
        %v1109 = vld [vmem:[#allocation10 + $0x78] sm:$0xff]
        %v1110 = vld [vmem:[#allocation10 + $0x80] sm:$0xf]
        %v1111 = vld [vmem:[#allocation10 + $0x84] sm:$0xff]
        %v1112 = vld [vmem:[#allocation10 + $0x8c] sm:$0xf]
        %v1113 = vld [vmem:[#allocation10 + $0x90] sm:$0xff]
        %v1114 = vld [vmem:[#allocation10 + $0x98] sm:$0xf]
        %v1115 = vld [vmem:[#allocation10 + $0x9c] sm:$0xff]
        %v1116 = vld [vmem:[#allocation10 + $0xa4] sm:$0xf]
        %v1117 = vld [vmem:[#allocation10 + $0xa8] sm:$0xff]
        %v1118 = vld [vmem:[#allocation10 + $0xb0] sm:$0xf]
        %v1119 = vld [vmem:[#allocation10 + $0xb4] sm:$0xff]
        %v1120 = vld [vmem:[#allocation10 + $0xbc] sm:$0xf]
        %v1121 = vld [vmem:[#allocation10 + $0xc0] sm:$0xff]
        %v1122 = vld [vmem:[#allocation10 + $0xc8] sm:$0xf]
        %v1123 = vld [vmem:[#allocation10 + $0xcc] sm:$0xff]
        %v1124 = vld [vmem:[#allocation10 + $0xd4] sm:$0xf]
        %v1125 = vld [vmem:[#allocation10 + $0xd8] sm:$0xff]
        %v1126 = vld [vmem:[#allocation10 + $0xe0] sm:$0xf]
        %v1127 = vld [vmem:[#allocation10 + $0xe4] sm:$0xff]
        %v1128 = vld [vmem:[#allocation10 + $0xec] sm:$0xf]
        %v1129 = vld [vmem:[#allocation10 + $0xf0] sm:$0xff]
        %v1130 = vld [vmem:[#allocation10 + $0xf8] sm:$0xf]
        %v1131 = vld [vmem:[#allocation10 + $0xfc] sm:$0xff]
        %v1132 = vld [vmem:[#allocation10 + $0x104] sm:$0xf]
        %v1133 = vld [vmem:[#allocation10 + $0x108] sm:$0xff]
        %v1134 = vld [vmem:[#allocation10 + $0x110] sm:$0xf]
        %v1135 = vld [vmem:[#allocation10 + $0x114] sm:$0xff]
        %v1136 = vld [vmem:[#allocation10 + $0x11c] sm:$0xf]
        %v1137 = vld [vmem:[#allocation10 + $0x120] sm:$0xff]
        %v1138 = vld [vmem:[#allocation10 + $0x128] sm:$0xf]
        %v1139 = vld [vmem:[#allocation10 + $0x12c] sm:$0xff]
        %v1140 = vld [vmem:[#allocation10 + $0x134] sm:$0xf]
        %v1141 = vld [vmem:[#allocation10 + $0x138] sm:$0xff]
        %v1142 = vld [vmem:[#allocation10 + $0x140] sm:$0xf]
        %v1143 = vld [vmem:[#allocation10 + $0x144] sm:$0xff]
        %v1144 = vld [vmem:[#allocation10 + $0x14c] sm:$0xf]
        %v1145 = vld [vmem:[#allocation10 + $0x150] sm:$0xff]
        %v1146 = vld [vmem:[#allocation10 + $0x158] sm:$0xf]
        %v1147 = vld [vmem:[#allocation10 + $0x15c] sm:$0xff]
        %v1148 = vld [vmem:[#allocation10 + $0x164] sm:$0xf]
        %v1149 = vld [vmem:[#allocation10 + $0x168] sm:$0xff]
        %v1150 = vld [vmem:[#allocation10 + $0x170] sm:$0xf]
        %v1151 = vld [vmem:[#allocation10 + $0x174] sm:$0xff]
        %v1152 = vld [vmem:[#allocation10 + $0x17c] sm:$0xf]
        %v1217 = vunpack.c.l.b16 %v1089
        %v1218 = vunpack.c.h.b16 %v1089
        %v1219 = vunpack.c.l.b16 %v1090
        %v1220 = vunpack.c.l.b16 %v1091
        %v1221 = vunpack.c.h.b16 %v1091
        %v1222 = vunpack.c.l.b16 %v1092
        %v1223 = vunpack.c.l.b16 %v1093
        %v1224 = vunpack.c.h.b16 %v1093
        %v1225 = vunpack.c.l.b16 %v1094
        %v1226 = vunpack.c.l.b16 %v1095
        %v1227 = vunpack.c.h.b16 %v1095
        %v1228 = vunpack.c.l.b16 %v1096
        %v1229 = vunpack.c.l.b16 %v1097
        %v1230 = vunpack.c.h.b16 %v1097
        %v1231 = vunpack.c.l.b16 %v1098
        %v1232 = vunpack.c.l.b16 %v1099
        %v1233 = vunpack.c.h.b16 %v1099
        %v1234 = vunpack.c.l.b16 %v1100
        %v1235 = vunpack.c.l.b16 %v1101
        %v1236 = vunpack.c.h.b16 %v1101
        %v1237 = vunpack.c.l.b16 %v1102
        %v1238 = vunpack.c.l.b16 %v1103
        %v1239 = vunpack.c.h.b16 %v1103
        %v1240 = vunpack.c.l.b16 %v1104
        %v1241 = vunpack.c.l.b16 %v1105
        %v1242 = vunpack.c.h.b16 %v1105
        %v1243 = vunpack.c.l.b16 %v1106
        %v1244 = vunpack.c.l.b16 %v1107
        %v1245 = vunpack.c.h.b16 %v1107
        %v1246 = vunpack.c.l.b16 %v1108
        %v1247 = vunpack.c.l.b16 %v1109
        %v1248 = vunpack.c.h.b16 %v1109
        %v1249 = vunpack.c.l.b16 %v1110
        %v1250 = vunpack.c.l.b16 %v1111
        %v1251 = vunpack.c.h.b16 %v1111
        %v1252 = vunpack.c.l.b16 %v1112
        %v1253 = vunpack.c.l.b16 %v1113
        %v1254 = vunpack.c.h.b16 %v1113
        %v1255 = vunpack.c.l.b16 %v1114
        %v1256 = vunpack.c.l.b16 %v1115
        %v1257 = vunpack.c.h.b16 %v1115
        %v1258 = vunpack.c.l.b16 %v1116
        %v1259 = vunpack.c.l.b16 %v1117
        %v1260 = vunpack.c.h.b16 %v1117
        %v1261 = vunpack.c.l.b16 %v1118
        %v1262 = vunpack.c.l.b16 %v1119
        %v1263 = vunpack.c.h.b16 %v1119
        %v1264 = vunpack.c.l.b16 %v1120
        %v1265 = vunpack.c.l.b16 %v1121
        %v1266 = vunpack.c.h.b16 %v1121
        %v1267 = vunpack.c.l.b16 %v1122
        %v1268 = vunpack.c.l.b16 %v1123
        %v1269 = vunpack.c.h.b16 %v1123
        %v1270 = vunpack.c.l.b16 %v1124
        %v1271 = vunpack.c.l.b16 %v1125
        %v1272 = vunpack.c.h.b16 %v1125
        %v1273 = vunpack.c.l.b16 %v1126
        %v1274 = vunpack.c.l.b16 %v1127
        %v1275 = vunpack.c.h.b16 %v1127
        %v1276 = vunpack.c.l.b16 %v1128
        %v1277 = vunpack.c.l.b16 %v1129
        %v1278 = vunpack.c.h.b16 %v1129
        %v1279 = vunpack.c.l.b16 %v1130
        %v1280 = vunpack.c.l.b16 %v1131
        %v1281 = vunpack.c.h.b16 %v1131
        %v1282 = vunpack.c.l.b16 %v1132
        %v1283 = vunpack.c.l.b16 %v1133
        %v1284 = vunpack.c.h.b16 %v1133
        %v1285 = vunpack.c.l.b16 %v1134
        %v1286 = vunpack.c.l.b16 %v1135
        %v1287 = vunpack.c.h.b16 %v1135
        %v1288 = vunpack.c.l.b16 %v1136
        %v1289 = vunpack.c.l.b16 %v1137
        %v1290 = vunpack.c.h.b16 %v1137
        %v1291 = vunpack.c.l.b16 %v1138
        %v1292 = vunpack.c.l.b16 %v1139
        %v1293 = vunpack.c.h.b16 %v1139
        %v1294 = vunpack.c.l.b16 %v1140
        %v1295 = vunpack.c.l.b16 %v1141
        %v1296 = vunpack.c.h.b16 %v1141
        %v1297 = vunpack.c.l.b16 %v1142
        %v1298 = vunpack.c.l.b16 %v1143
        %v1299 = vunpack.c.h.b16 %v1143
        %v1300 = vunpack.c.l.b16 %v1144
        %v1301 = vunpack.c.l.b16 %v1145
        %v1302 = vunpack.c.h.b16 %v1145
        %v1303 = vunpack.c.l.b16 %v1146
        %v1304 = vunpack.c.l.b16 %v1147
        %v1305 = vunpack.c.h.b16 %v1147
        %v1306 = vunpack.c.l.b16 %v1148
        %v1307 = vunpack.c.l.b16 %v1149
        %v1308 = vunpack.c.h.b16 %v1149
        %v1309 = vunpack.c.l.b16 %v1150
        %v1310 = vunpack.c.l.b16 %v1151
        %v1311 = vunpack.c.h.b16 %v1151
        %v1312 = vunpack.c.l.b16 %v1152
        %v1313 = vpack.c.b16 %v1220, %v1217
        %v1314 = vpack.c.b16 %v1221, %v1218
        %v1315 = vpack.c.b16 %v1222, %v1219
        %v1316 = vpack.c.b16 %v1226, %v1223
        %v1317 = vpack.c.b16 %v1227, %v1224
        %v1318 = vpack.c.b16 %v1228, %v1225
        %v1319 = vpack.c.b16 %v1232, %v1229
        %v1320 = vpack.c.b16 %v1233, %v1230
        %v1321 = vpack.c.b16 %v1234, %v1231
        %v1322 = vpack.c.b16 %v1238, %v1235
        %v1323 = vpack.c.b16 %v1239, %v1236
        %v1324 = vpack.c.b16 %v1240, %v1237
        %v1325 = vpack.c.b16 %v1244, %v1241
        %v1326 = vpack.c.b16 %v1245, %v1242
        %v1327 = vpack.c.b16 %v1246, %v1243
        %v1328 = vpack.c.b16 %v1250, %v1247
        %v1329 = vpack.c.b16 %v1251, %v1248
        %v1330 = vpack.c.b16 %v1252, %v1249
        %v1331 = vpack.c.b16 %v1256, %v1253
        %v1332 = vpack.c.b16 %v1257, %v1254
        %v1333 = vpack.c.b16 %v1258, %v1255
        %v1334 = vpack.c.b16 %v1262, %v1259
        %v1335 = vpack.c.b16 %v1263, %v1260
        %v1336 = vpack.c.b16 %v1264, %v1261
        %v1337 = vpack.c.b16 %v1268, %v1265
        %v1338 = vpack.c.b16 %v1269, %v1266
        %v1339 = vpack.c.b16 %v1270, %v1267
        %v1340 = vpack.c.b16 %v1274, %v1271
        %v1341 = vpack.c.b16 %v1275, %v1272
        %v1342 = vpack.c.b16 %v1276, %v1273
        %v1343 = vpack.c.b16 %v1280, %v1277
        %v1344 = vpack.c.b16 %v1281, %v1278
        %v1345 = vpack.c.b16 %v1282, %v1279
        %v1346 = vpack.c.b16 %v1286, %v1283
        %v1347 = vpack.c.b16 %v1287, %v1284
        %v1348 = vpack.c.b16 %v1288, %v1285
        %v1349 = vpack.c.b16 %v1292, %v1289
        %v1350 = vpack.c.b16 %v1293, %v1290
        %v1351 = vpack.c.b16 %v1294, %v1291
        %v1352 = vpack.c.b16 %v1298, %v1295
        %v1353 = vpack.c.b16 %v1299, %v1296
        %v1354 = vpack.c.b16 %v1300, %v1297
        %v1355 = vpack.c.b16 %v1304, %v1301
        %v1356 = vpack.c.b16 %v1305, %v1302
        %v1357 = vpack.c.b16 %v1306, %v1303
        %v1358 = vpack.c.b16 %v1310, %v1307
        %v1359 = vpack.c.b16 %v1311, %v1308
        %v1360 = vpack.c.b16 %v1312, %v1309
        %1409 = vmatprep.subr.bf16.mxu0 %v1335
        %1410 = vmatpush1.bf16.msra.mxu0 %v1334
        %1411 = vmatprep.subr.bf16.mxu0 %v1332
        %1412 = vmatpush1.bf16.msra.mxu0 %v1331
        %1413 = vmatprep.subr.bf16.mxu0 %v1329
        %1414 = vmatpush1.bf16.msra.mxu0 %v1328
        %1415 = vmatprep.subr.bf16.mxu0 %v1326
        %1416 = vmatpush1.bf16.msra.mxu0 %v1325
        %1417 = vmatprep.subr.bf16.mxu0 %v1323
        %1418 = vmatpush1.bf16.msra.mxu0 %v1322
        %1419 = vmatprep.subr.bf16.mxu0 %v1320
        %1420 = vmatpush1.bf16.msra.mxu0 %v1319
        %1421 = vmatprep.subr.bf16.mxu0 %v1317
        %1422 = vmatpush1.bf16.msra.mxu0 %v1316
        %1423 = vmatprep.subr.bf16.mxu0 %v1314
        %1424 = vmatpush1.bf16.msra.mxu0 %v1313
        %1425 = vmatprep.subr.bf16.mxu0 %v1359
        %1426 = vmatpush2.bf16.msra.mxu0 %v1358
        %1427 = vmatprep.subr.bf16.mxu0 %v1356
        %1428 = vmatpush2.bf16.msra.mxu0 %v1355
        %1429 = vmatprep.subr.bf16.mxu0 %v1353
        %1430 = vmatpush2.bf16.msra.mxu0 %v1352
        %1431 = vmatprep.subr.bf16.mxu0 %v1350
        %1432 = vmatpush2.bf16.msra.mxu0 %v1349
        %1433 = vmatprep.subr.bf16.mxu0 %v1347
        %1434 = vmatpush2.bf16.msra.mxu0 %v1346
        %1435 = vmatprep.subr.bf16.mxu0 %v1344
        %1436 = vmatpush2.bf16.msra.mxu0 %v1343
        %1437 = vmatprep.subr.bf16.mxu0 %v1341
        %1438 = vmatpush2.bf16.msra.mxu0 %v1340
        %1439 = vmatprep.subr.bf16.mxu0 %v1338
        %1440 = vmatpush2.bf16.msra.mxu0 %v1337
        %1441 = vmatprep.mubr.bf16.mxu0 %v639
        %1442 = vmatmul.mubr.bf16.gmra.mxu0 %v638
        %v1443 = vpop.f32.mrf.mxu0
        %v1444 = vadd.f32 0.0, %v1443
        %v1445 = vpop.f32.mrf.mxu0
        %v1446 = vadd.f32 0.0, %v1445
        %v1447 = vpop.f32.mrf.mxu0
        %v1448 = vpop.f32.mrf.mxu0
        %1449 = vdwg.mxu0
        %1450 = vmatprep.subr.bf16.mxu0 0
        %1451 = vmatpush1.bf16.msra.mxu0 %v1336
        %1452 = vmatprep.subr.bf16.mxu0 0
        %1453 = vmatpush1.bf16.msra.mxu0 %v1333
        %1454 = vmatprep.subr.bf16.mxu0 0
        %1455 = vmatpush1.bf16.msra.mxu0 %v1330
        %1456 = vmatprep.subr.bf16.mxu0 0
        %1457 = vmatpush1.bf16.msra.mxu0 %v1327
        %1458 = vmatprep.subr.bf16.mxu0 0
        %1459 = vmatpush1.bf16.msra.mxu0 %v1324
        %1460 = vmatprep.subr.bf16.mxu0 0
        %1461 = vmatpush1.bf16.msra.mxu0 %v1321
        %1462 = vmatprep.subr.bf16.mxu0 0
        %1463 = vmatpush1.bf16.msra.mxu0 %v1318
        %1464 = vmatprep.subr.bf16.mxu0 0
        %1465 = vmatpush1.bf16.msra.mxu0 %v1315
        %1466 = vmatprep.subr.bf16.mxu0 0
        %1467 = vmatpush2.bf16.msra.mxu0 %v1360
        %1468 = vmatprep.subr.bf16.mxu0 0
        %1469 = vmatpush2.bf16.msra.mxu0 %v1357
        %1470 = vmatprep.subr.bf16.mxu0 0
        %1471 = vmatpush2.bf16.msra.mxu0 %v1354
        %1472 = vmatprep.subr.bf16.mxu0 0
        %1473 = vmatpush2.bf16.msra.mxu0 %v1351
        %1474 = vmatprep.subr.bf16.mxu0 0
        %1475 = vmatpush2.bf16.msra.mxu0 %v1348
        %1476 = vmatprep.subr.bf16.mxu0 0
        %1477 = vmatpush2.bf16.msra.mxu0 %v1345
        %1478 = vmatprep.subr.bf16.mxu0 0
        %1479 = vmatpush2.bf16.msra.mxu0 %v1342
        %1480 = vmatprep.subr.bf16.mxu0 0
        %1481 = vmatpush2.bf16.msra.mxu0 %v1339
        %1482 = vmatprep.mubr.bf16.mxu0 %v639
        %1483 = vmatmul.mubr.bf16.gmra.mxu0 %v638
        %v1484 = vpop.f32.mrf.mxu0
        %v1485 = vadd.f32 0.0, %v1484
        %v1486 = vpop.f32.mrf.mxu0
        %v1487 = vpop.f32.mrf.mxu0
        %v1488 = vpop.f32.mrf.mxu0
        %1489 = vdwg.mxu0
        %v1490 = vld [vmem:[#allocation11] sm:$0xff]
        %v1491 = vld [vmem:[#allocation11 + $0x8] sm:$0xf]
        %v1492 = vld [vmem:[#allocation11 + $0xc] sm:$0xff]
        %v1493 = vld [vmem:[#allocation11 + $0x14] sm:$0xf]
        %v1494 = vld [vmem:[#allocation11 + $0x18] sm:$0xff]
        %v1495 = vld [vmem:[#allocation11 + $0x20] sm:$0xf]
        %v1496 = vld [vmem:[#allocation11 + $0x24] sm:$0xff]
        %v1497 = vld [vmem:[#allocation11 + $0x2c] sm:$0xf]
        %v1498 = vld [vmem:[#allocation11 + $0x30] sm:$0xff]
        %v1499 = vld [vmem:[#allocation11 + $0x38] sm:$0xf]
        %v1500 = vld [vmem:[#allocation11 + $0x3c] sm:$0xff]
        %v1501 = vld [vmem:[#allocation11 + $0x44] sm:$0xf]
        %v1502 = vld [vmem:[#allocation11 + $0x48] sm:$0xff]
        %v1503 = vld [vmem:[#allocation11 + $0x50] sm:$0xf]
        %v1504 = vld [vmem:[#allocation11 + $0x54] sm:$0xff]
        %v1505 = vld [vmem:[#allocation11 + $0x5c] sm:$0xf]
        %v1506 = vld [vmem:[#allocation11 + $0x60] sm:$0xff]
        %v1507 = vld [vmem:[#allocation11 + $0x68] sm:$0xf]
        %v1508 = vld [vmem:[#allocation11 + $0x6c] sm:$0xff]
        %v1509 = vld [vmem:[#allocation11 + $0x74] sm:$0xf]
        %v1510 = vld [vmem:[#allocation11 + $0x78] sm:$0xff]
        %v1511 = vld [vmem:[#allocation11 + $0x80] sm:$0xf]
        %v1512 = vld [vmem:[#allocation11 + $0x84] sm:$0xff]
        %v1513 = vld [vmem:[#allocation11 + $0x8c] sm:$0xf]
        %v1514 = vld [vmem:[#allocation11 + $0x90] sm:$0xff]
        %v1515 = vld [vmem:[#allocation11 + $0x98] sm:$0xf]
        %v1516 = vld [vmem:[#allocation11 + $0x9c] sm:$0xff]
        %v1517 = vld [vmem:[#allocation11 + $0xa4] sm:$0xf]
        %v1518 = vld [vmem:[#allocation11 + $0xa8] sm:$0xff]
        %v1519 = vld [vmem:[#allocation11 + $0xb0] sm:$0xf]
        %v1520 = vld [vmem:[#allocation11 + $0xb4] sm:$0xff]
        %v1521 = vld [vmem:[#allocation11 + $0xbc] sm:$0xf]
        %v1522 = vld [vmem:[#allocation11 + $0xc0] sm:$0xff]
        %v1523 = vld [vmem:[#allocation11 + $0xc8] sm:$0xf]
        %v1524 = vld [vmem:[#allocation11 + $0xcc] sm:$0xff]
        %v1525 = vld [vmem:[#allocation11 + $0xd4] sm:$0xf]
        %v1526 = vld [vmem:[#allocation11 + $0xd8] sm:$0xff]
        %v1527 = vld [vmem:[#allocation11 + $0xe0] sm:$0xf]
        %v1528 = vld [vmem:[#allocation11 + $0xe4] sm:$0xff]
        %v1529 = vld [vmem:[#allocation11 + $0xec] sm:$0xf]
        %v1530 = vld [vmem:[#allocation11 + $0xf0] sm:$0xff]
        %v1531 = vld [vmem:[#allocation11 + $0xf8] sm:$0xf]
        %v1532 = vld [vmem:[#allocation11 + $0xfc] sm:$0xff]
        %v1533 = vld [vmem:[#allocation11 + $0x104] sm:$0xf]
        %v1534 = vld [vmem:[#allocation11 + $0x108] sm:$0xff]
        %v1535 = vld [vmem:[#allocation11 + $0x110] sm:$0xf]
        %v1536 = vld [vmem:[#allocation11 + $0x114] sm:$0xff]
        %v1537 = vld [vmem:[#allocation11 + $0x11c] sm:$0xf]
        %v1538 = vld [vmem:[#allocation11 + $0x120] sm:$0xff]
        %v1539 = vld [vmem:[#allocation11 + $0x128] sm:$0xf]
        %v1540 = vld [vmem:[#allocation11 + $0x12c] sm:$0xff]
        %v1541 = vld [vmem:[#allocation11 + $0x134] sm:$0xf]
        %v1542 = vld [vmem:[#allocation11 + $0x138] sm:$0xff]
        %v1543 = vld [vmem:[#allocation11 + $0x140] sm:$0xf]
        %v1544 = vld [vmem:[#allocation11 + $0x144] sm:$0xff]
        %v1545 = vld [vmem:[#allocation11 + $0x14c] sm:$0xf]
        %v1546 = vld [vmem:[#allocation11 + $0x150] sm:$0xff]
        %v1547 = vld [vmem:[#allocation11 + $0x158] sm:$0xf]
        %v1548 = vld [vmem:[#allocation11 + $0x15c] sm:$0xff]
        %v1549 = vld [vmem:[#allocation11 + $0x164] sm:$0xf]
        %v1550 = vld [vmem:[#allocation11 + $0x168] sm:$0xff]
        %v1551 = vld [vmem:[#allocation11 + $0x170] sm:$0xf]
        %v1552 = vld [vmem:[#allocation11 + $0x174] sm:$0xff]
        %v1553 = vld [vmem:[#allocation11 + $0x17c] sm:$0xf]
        %v1618 = vunpack.c.l.b16 %v1490
        %v1619 = vunpack.c.h.b16 %v1490
        %v1620 = vunpack.c.l.b16 %v1491
        %v1621 = vunpack.c.l.b16 %v1492
        %v1622 = vunpack.c.h.b16 %v1492
        %v1623 = vunpack.c.l.b16 %v1493
        %v1624 = vunpack.c.l.b16 %v1494
        %v1625 = vunpack.c.h.b16 %v1494
        %v1626 = vunpack.c.l.b16 %v1495
        %v1627 = vunpack.c.l.b16 %v1496
        %v1628 = vunpack.c.h.b16 %v1496
        %v1629 = vunpack.c.l.b16 %v1497
        %v1630 = vunpack.c.l.b16 %v1498
        %v1631 = vunpack.c.h.b16 %v1498
        %v1632 = vunpack.c.l.b16 %v1499
        %v1633 = vunpack.c.l.b16 %v1500
        %v1634 = vunpack.c.h.b16 %v1500
        %v1635 = vunpack.c.l.b16 %v1501
        %v1636 = vunpack.c.l.b16 %v1502
        %v1637 = vunpack.c.h.b16 %v1502
        %v1638 = vunpack.c.l.b16 %v1503
        %v1639 = vunpack.c.l.b16 %v1504
        %v1640 = vunpack.c.h.b16 %v1504
        %v1641 = vunpack.c.l.b16 %v1505
        %v1642 = vunpack.c.l.b16 %v1506
        %v1643 = vunpack.c.h.b16 %v1506
        %v1644 = vunpack.c.l.b16 %v1507
        %v1645 = vunpack.c.l.b16 %v1508
        %v1646 = vunpack.c.h.b16 %v1508
        %v1647 = vunpack.c.l.b16 %v1509
        %v1648 = vunpack.c.l.b16 %v1510
        %v1649 = vunpack.c.h.b16 %v1510
        %v1650 = vunpack.c.l.b16 %v1511
        %v1651 = vunpack.c.l.b16 %v1512
        %v1652 = vunpack.c.h.b16 %v1512
        %v1653 = vunpack.c.l.b16 %v1513
        %v1654 = vunpack.c.l.b16 %v1514
        %v1655 = vunpack.c.h.b16 %v1514
        %v1656 = vunpack.c.l.b16 %v1515
        %v1657 = vunpack.c.l.b16 %v1516
        %v1658 = vunpack.c.h.b16 %v1516
        %v1659 = vunpack.c.l.b16 %v1517
        %v1660 = vunpack.c.l.b16 %v1518
        %v1661 = vunpack.c.h.b16 %v1518
        %v1662 = vunpack.c.l.b16 %v1519
        %v1663 = vunpack.c.l.b16 %v1520
        %v1664 = vunpack.c.h.b16 %v1520
        %v1665 = vunpack.c.l.b16 %v1521
        %v1666 = vunpack.c.l.b16 %v1522
        %v1667 = vunpack.c.h.b16 %v1522
        %v1668 = vunpack.c.l.b16 %v1523
        %v1669 = vunpack.c.l.b16 %v1524
        %v1670 = vunpack.c.h.b16 %v1524
        %v1671 = vunpack.c.l.b16 %v1525
        %v1672 = vunpack.c.l.b16 %v1526
        %v1673 = vunpack.c.h.b16 %v1526
        %v1674 = vunpack.c.l.b16 %v1527
        %v1675 = vunpack.c.l.b16 %v1528
        %v1676 = vunpack.c.h.b16 %v1528
        %v1677 = vunpack.c.l.b16 %v1529
        %v1678 = vunpack.c.l.b16 %v1530
        %v1679 = vunpack.c.h.b16 %v1530
        %v1680 = vunpack.c.l.b16 %v1531
        %v1681 = vunpack.c.l.b16 %v1532
        %v1682 = vunpack.c.h.b16 %v1532
        %v1683 = vunpack.c.l.b16 %v1533
        %v1684 = vunpack.c.l.b16 %v1534
        %v1685 = vunpack.c.h.b16 %v1534
        %v1686 = vunpack.c.l.b16 %v1535
        %v1687 = vunpack.c.l.b16 %v1536
        %v1688 = vunpack.c.h.b16 %v1536
        %v1689 = vunpack.c.l.b16 %v1537
        %v1690 = vunpack.c.l.b16 %v1538
        %v1691 = vunpack.c.h.b16 %v1538
        %v1692 = vunpack.c.l.b16 %v1539
        %v1693 = vunpack.c.l.b16 %v1540
        %v1694 = vunpack.c.h.b16 %v1540
        %v1695 = vunpack.c.l.b16 %v1541
        %v1696 = vunpack.c.l.b16 %v1542
        %v1697 = vunpack.c.h.b16 %v1542
        %v1698 = vunpack.c.l.b16 %v1543
        %v1699 = vunpack.c.l.b16 %v1544
        %v1700 = vunpack.c.h.b16 %v1544
        %v1701 = vunpack.c.l.b16 %v1545
        %v1702 = vunpack.c.l.b16 %v1546
        %v1703 = vunpack.c.h.b16 %v1546
        %v1704 = vunpack.c.l.b16 %v1547
        %v1705 = vunpack.c.l.b16 %v1548
        %v1706 = vunpack.c.h.b16 %v1548
        %v1707 = vunpack.c.l.b16 %v1549
        %v1708 = vunpack.c.l.b16 %v1550
        %v1709 = vunpack.c.h.b16 %v1550
        %v1710 = vunpack.c.l.b16 %v1551
        %v1711 = vunpack.c.l.b16 %v1552
        %v1712 = vunpack.c.h.b16 %v1552
        %v1713 = vunpack.c.l.b16 %v1553
        %v1714 = vpack.c.b16 %v1621, %v1618
        %v1715 = vpack.c.b16 %v1622, %v1619
        %v1716 = vpack.c.b16 %v1623, %v1620
        %v1717 = vpack.c.b16 %v1627, %v1624
        %v1718 = vpack.c.b16 %v1628, %v1625
        %v1719 = vpack.c.b16 %v1629, %v1626
        %v1720 = vpack.c.b16 %v1633, %v1630
        %v1721 = vpack.c.b16 %v1634, %v1631
        %v1722 = vpack.c.b16 %v1635, %v1632
        %v1723 = vpack.c.b16 %v1639, %v1636
        %v1724 = vpack.c.b16 %v1640, %v1637
        %v1725 = vpack.c.b16 %v1641, %v1638
        %v1726 = vpack.c.b16 %v1645, %v1642
        %v1727 = vpack.c.b16 %v1646, %v1643
        %v1728 = vpack.c.b16 %v1647, %v1644
        %v1729 = vpack.c.b16 %v1651, %v1648
        %v1730 = vpack.c.b16 %v1652, %v1649
        %v1731 = vpack.c.b16 %v1653, %v1650
        %v1732 = vpack.c.b16 %v1657, %v1654
        %v1733 = vpack.c.b16 %v1658, %v1655
        %v1734 = vpack.c.b16 %v1659, %v1656
        %v1735 = vpack.c.b16 %v1663, %v1660
        %v1736 = vpack.c.b16 %v1664, %v1661
        %v1737 = vpack.c.b16 %v1665, %v1662
        %v1738 = vpack.c.b16 %v1669, %v1666
        %v1739 = vpack.c.b16 %v1670, %v1667
        %v1740 = vpack.c.b16 %v1671, %v1668
        %v1741 = vpack.c.b16 %v1675, %v1672
        %v1742 = vpack.c.b16 %v1676, %v1673
        %v1743 = vpack.c.b16 %v1677, %v1674
        %v1744 = vpack.c.b16 %v1681, %v1678
        %v1745 = vpack.c.b16 %v1682, %v1679
        %v1746 = vpack.c.b16 %v1683, %v1680
        %v1747 = vpack.c.b16 %v1687, %v1684
        %v1748 = vpack.c.b16 %v1688, %v1685
        %v1749 = vpack.c.b16 %v1689, %v1686
        %v1750 = vpack.c.b16 %v1693, %v1690
        %v1751 = vpack.c.b16 %v1694, %v1691
        %v1752 = vpack.c.b16 %v1695, %v1692
        %v1753 = vpack.c.b16 %v1699, %v1696
        %v1754 = vpack.c.b16 %v1700, %v1697
        %v1755 = vpack.c.b16 %v1701, %v1698
        %v1756 = vpack.c.b16 %v1705, %v1702
        %v1757 = vpack.c.b16 %v1706, %v1703
        %v1758 = vpack.c.b16 %v1707, %v1704
        %v1759 = vpack.c.b16 %v1711, %v1708
        %v1760 = vpack.c.b16 %v1712, %v1709
        %v1761 = vpack.c.b16 %v1713, %v1710
        %1810 = vmatprep.subr.bf16.mxu0 %v1736
        %1811 = vmatpush1.bf16.msra.mxu0 %v1735
        %1812 = vmatprep.subr.bf16.mxu0 %v1733
        %1813 = vmatpush1.bf16.msra.mxu0 %v1732
        %1814 = vmatprep.subr.bf16.mxu0 %v1730
        %1815 = vmatpush1.bf16.msra.mxu0 %v1729
        %1816 = vmatprep.subr.bf16.mxu0 %v1727
        %1817 = vmatpush1.bf16.msra.mxu0 %v1726
        %1818 = vmatprep.subr.bf16.mxu0 %v1724
        %1819 = vmatpush1.bf16.msra.mxu0 %v1723
        %1820 = vmatprep.subr.bf16.mxu0 %v1721
        %1821 = vmatpush1.bf16.msra.mxu0 %v1720
        %1822 = vmatprep.subr.bf16.mxu0 %v1718
        %1823 = vmatpush1.bf16.msra.mxu0 %v1717
        %1824 = vmatprep.subr.bf16.mxu0 %v1715
        %1825 = vmatpush1.bf16.msra.mxu0 %v1714
        %1826 = vmatprep.subr.bf16.mxu0 %v1760
        %1827 = vmatpush2.bf16.msra.mxu0 %v1759
        %1828 = vmatprep.subr.bf16.mxu0 %v1757
        %1829 = vmatpush2.bf16.msra.mxu0 %v1756
        %1830 = vmatprep.subr.bf16.mxu0 %v1754
        %1831 = vmatpush2.bf16.msra.mxu0 %v1753
        %1832 = vmatprep.subr.bf16.mxu0 %v1751
        %1833 = vmatpush2.bf16.msra.mxu0 %v1750
        %1834 = vmatprep.subr.bf16.mxu0 %v1748
        %1835 = vmatpush2.bf16.msra.mxu0 %v1747
        %1836 = vmatprep.subr.bf16.mxu0 %v1745
        %1837 = vmatpush2.bf16.msra.mxu0 %v1744
        %1838 = vmatprep.subr.bf16.mxu0 %v1742
        %1839 = vmatpush2.bf16.msra.mxu0 %v1741
        %1840 = vmatprep.subr.bf16.mxu0 %v1739
        %1841 = vmatpush2.bf16.msra.mxu0 %v1738
        %1842 = vmatprep.mubr.bf16.mxu0 %v1088
        %1843 = vmatmul.mubr.bf16.gmra.mxu0 %v1087
        %v1844 = vpop.f32.mrf.mxu0
        %v1845 = vadd.f32 0.0, %v1844
        %v1846 = vpop.f32.mrf.mxu0
        %v1847 = vadd.f32 0.0, %v1846
        %v1848 = vpop.f32.mrf.mxu0
        %v1849 = vpop.f32.mrf.mxu0
        %1850 = vdwg.mxu0
        %1851 = vmatprep.subr.bf16.mxu0 0
        %1852 = vmatpush1.bf16.msra.mxu0 %v1737
        %1853 = vmatprep.subr.bf16.mxu0 0
        %1854 = vmatpush1.bf16.msra.mxu0 %v1734
        %1855 = vmatprep.subr.bf16.mxu0 0
        %1856 = vmatpush1.bf16.msra.mxu0 %v1731
        %1857 = vmatprep.subr.bf16.mxu0 0
        %1858 = vmatpush1.bf16.msra.mxu0 %v1728
        %1859 = vmatprep.subr.bf16.mxu0 0
        %1860 = vmatpush1.bf16.msra.mxu0 %v1725
        %1861 = vmatprep.subr.bf16.mxu0 0
        %1862 = vmatpush1.bf16.msra.mxu0 %v1722
        %1863 = vmatprep.subr.bf16.mxu0 0
        %1864 = vmatpush1.bf16.msra.mxu0 %v1719
        %1865 = vmatprep.subr.bf16.mxu0 0
        %1866 = vmatpush1.bf16.msra.mxu0 %v1716
        %1867 = vmatprep.subr.bf16.mxu0 0
        %1868 = vmatpush2.bf16.msra.mxu0 %v1761
        %1869 = vmatprep.subr.bf16.mxu0 0
        %1870 = vmatpush2.bf16.msra.mxu0 %v1758
        %1871 = vmatprep.subr.bf16.mxu0 0
        %1872 = vmatpush2.bf16.msra.mxu0 %v1755
        %1873 = vmatprep.subr.bf16.mxu0 0
        %1874 = vmatpush2.bf16.msra.mxu0 %v1752
        %1875 = vmatprep.subr.bf16.mxu0 0
        %1876 = vmatpush2.bf16.msra.mxu0 %v1749
        %1877 = vmatprep.subr.bf16.mxu0 0
        %1878 = vmatpush2.bf16.msra.mxu0 %v1746
        %1879 = vmatprep.subr.bf16.mxu0 0
        %1880 = vmatpush2.bf16.msra.mxu0 %v1743
        %1881 = vmatprep.subr.bf16.mxu0 0
        %1882 = vmatpush2.bf16.msra.mxu0 %v1740
        %1883 = vmatprep.mubr.bf16.mxu0 %v1088
        %1884 = vmatmul.mubr.bf16.gmra.mxu0 %v1087
        %v1885 = vpop.f32.mrf.mxu0
        %v1886 = vadd.f32 0.0, %v1885
        %v1887 = vpop.f32.mrf.mxu0
        %v1888 = vpop.f32.mrf.mxu0
        %v1889 = vpop.f32.mrf.mxu0
        %1890 = vdwg.mxu0
        %v1891 = vadd.f32 %v1444, %v1845
        %v1892 = vadd.f32 %v1446, %v1847
        %v1893 = vld [vmem:[%s10] sm:$0x3]
        %v1895 = vlaneseq
        %v1896 = vshrl.u32 %v1895, 7
        %v1897 = vsub.s32 0, %v1896
        %v1898 = vrot.slane %v1893, %v1897
        %v1899 = vlaneseq
        %v1900 = vshrl.u32 %v1899, 7
        %v1901 = vsub.s32 1, %v1900
        %v1902 = vrot.slane %v1893, %v1901
        %v1905 = vadd.f32 %v1891, %v1898
        %v1906 = vadd.f32 %v1892, %v1902
        %v1907 = vxor.u32 %v1905, 2147483648
        %v1908 = vxor.u32 %v1906, 2147483648
        %v1909 = vmul.f32 %v1907, 1.442695
        %v1910 = vpow.pop %v1909
        %v1911 = vmul.f32 %v1908, 1.442695
        %v1912 = vpow.pop %v1911
        %v1913 = vadd.f32 %v1910, 1.0
        %v1914 = vadd.f32 %v1912, 1.0
        %v1915 = vrcp.pop %v1913
        %v1916 = vmul.f32 1.0, %v1915
        %v1917 = vrcp.pop %v1914
        %v1918 = vmul.f32 1.0, %v1917
        %v1919 = vsub.f32 %v636, %v1085
        %v1920 = vsub.f32 %v637, %v1086
        %v1921 = vmul.f32 %v1916, %v1919
        %v1922 = vmul.f32 %v1918, %v1920
        %v1923 = vadd.f32 %v1085, %v1921
        %v1924 = vadd.f32 %v1086, %v1922
        %v1925 = vpack.c.bf16 %v1923, %v1923
        %v1926 = vpack.c.bf16 %v1924, %v1924
        %v1927 = vld [vmem:[#allocation13] sm:$0xf]
        %v1928 = vld [vmem:[#allocation13 + $0x4] sm:$0xf]
        %v1929 = vld [vmem:[#allocation13 + $0x8] sm:$0xf]
        %v1930 = vld [vmem:[#allocation13 + $0xc] sm:$0xf]
        %v1931 = vld [vmem:[#allocation13 + $0x10] sm:$0xf]
        %v1932 = vld [vmem:[#allocation13 + $0x14] sm:$0xf]
        %v1933 = vld [vmem:[#allocation13 + $0x18] sm:$0xf]
        %v1934 = vld [vmem:[#allocation13 + $0x1c] sm:$0xf]
        %v1935 = vld [vmem:[#allocation13 + $0x20] sm:$0xf]
        %v1936 = vld [vmem:[#allocation13 + $0x24] sm:$0xf]
        %v1937 = vld [vmem:[#allocation13 + $0x28] sm:$0xf]
        %v1938 = vld [vmem:[#allocation13 + $0x2c] sm:$0xf]
        %v1939 = vld [vmem:[#allocation13 + $0x30] sm:$0xf]
        %v1940 = vld [vmem:[#allocation13 + $0x34] sm:$0xf]
        %v1941 = vld [vmem:[#allocation13 + $0x38] sm:$0xf]
        %v1942 = vld [vmem:[#allocation13 + $0x3c] sm:$0xf]
        %v1943 = vld [vmem:[#allocation13 + $0x40] sm:$0xf]
        %v1944 = vld [vmem:[#allocation13 + $0x44] sm:$0xf]
        %v1945 = vld [vmem:[#allocation13 + $0x48] sm:$0xf]
        %v1946 = vld [vmem:[#allocation13 + $0x4c] sm:$0xf]
        %v1947 = vld [vmem:[#allocation13 + $0x50] sm:$0xf]
        %v1948 = vld [vmem:[#allocation13 + $0x54] sm:$0xf]
        %v1949 = vld [vmem:[#allocation13 + $0x58] sm:$0xf]
        %v1950 = vld [vmem:[#allocation13 + $0x5c] sm:$0xf]
        %v1951 = vld [vmem:[#allocation13 + $0x60] sm:$0xf]
        %v1952 = vld [vmem:[#allocation13 + $0x64] sm:$0xf]
        %v1953 = vld [vmem:[#allocation13 + $0x68] sm:$0xf]
        %v1954 = vld [vmem:[#allocation13 + $0x6c] sm:$0xf]
        %v1955 = vld [vmem:[#allocation13 + $0x70] sm:$0xf]
        %v1956 = vld [vmem:[#allocation13 + $0x74] sm:$0xf]
        %v1957 = vld [vmem:[#allocation13 + $0x78] sm:$0xf]
        %v1958 = vld [vmem:[#allocation13 + $0x7c] sm:$0xf]
        %v1991 = vunpack.c.l.b16 %v1927
        %v1992 = vunpack.c.l.b16 %v1928
        %v1993 = vunpack.c.l.b16 %v1929
        %v1994 = vunpack.c.l.b16 %v1930
        %v1995 = vunpack.c.l.b16 %v1931
        %v1996 = vunpack.c.l.b16 %v1932
        %v1997 = vunpack.c.l.b16 %v1933
        %v1998 = vunpack.c.l.b16 %v1934
        %v1999 = vunpack.c.l.b16 %v1935
        %v2000 = vunpack.c.l.b16 %v1936
        %v2001 = vunpack.c.l.b16 %v1937
        %v2002 = vunpack.c.l.b16 %v1938
        %v2003 = vunpack.c.l.b16 %v1939
        %v2004 = vunpack.c.l.b16 %v1940
        %v2005 = vunpack.c.l.b16 %v1941
        %v2006 = vunpack.c.l.b16 %v1942
        %v2007 = vunpack.c.l.b16 %v1943
        %v2008 = vunpack.c.l.b16 %v1944
        %v2009 = vunpack.c.l.b16 %v1945
        %v2010 = vunpack.c.l.b16 %v1946
        %v2011 = vunpack.c.l.b16 %v1947
        %v2012 = vunpack.c.l.b16 %v1948
        %v2013 = vunpack.c.l.b16 %v1949
        %v2014 = vunpack.c.l.b16 %v1950
        %v2015 = vunpack.c.l.b16 %v1951
        %v2016 = vunpack.c.l.b16 %v1952
        %v2017 = vunpack.c.l.b16 %v1953
        %v2018 = vunpack.c.l.b16 %v1954
        %v2019 = vunpack.c.l.b16 %v1955
        %v2020 = vunpack.c.l.b16 %v1956
        %v2021 = vunpack.c.l.b16 %v1957
        %v2022 = vunpack.c.l.b16 %v1958
        %v2023 = vpack.c.b16 %v1992, %v1991
        %v2024 = vpack.c.b16 %v1994, %v1993
        %v2025 = vpack.c.b16 %v1996, %v1995
        %v2026 = vpack.c.b16 %v1998, %v1997
        %v2027 = vpack.c.b16 %v2000, %v1999
        %v2028 = vpack.c.b16 %v2002, %v2001
        %v2029 = vpack.c.b16 %v2004, %v2003
        %v2030 = vpack.c.b16 %v2006, %v2005
        %v2031 = vpack.c.b16 %v2008, %v2007
        %v2032 = vpack.c.b16 %v2010, %v2009
        %v2033 = vpack.c.b16 %v2012, %v2011
        %v2034 = vpack.c.b16 %v2014, %v2013
        %v2035 = vpack.c.b16 %v2016, %v2015
        %v2036 = vpack.c.b16 %v2018, %v2017
        %v2037 = vpack.c.b16 %v2020, %v2019
        %v2038 = vpack.c.b16 %v2022, %v2021
        %2055 = vmatprep.subr.bf16.mxu0 0
        %2056 = vmatpush1.bf16.msra.mxu0 %v2030
        %2057 = vmatprep.subr.bf16.mxu0 0
        %2058 = vmatpush1.bf16.msra.mxu0 %v2029
        %2059 = vmatprep.subr.bf16.mxu0 0
        %2060 = vmatpush1.bf16.msra.mxu0 %v2028
        %2061 = vmatprep.subr.bf16.mxu0 0
        %2062 = vmatpush1.bf16.msra.mxu0 %v2027
        %2063 = vmatprep.subr.bf16.mxu0 0
        %2064 = vmatpush1.bf16.msra.mxu0 %v2026
        %2065 = vmatprep.subr.bf16.mxu0 0
        %2066 = vmatpush1.bf16.msra.mxu0 %v2025
        %2067 = vmatprep.subr.bf16.mxu0 0
        %2068 = vmatpush1.bf16.msra.mxu0 %v2024
        %2069 = vmatprep.subr.bf16.mxu0 0
        %2070 = vmatpush1.bf16.msra.mxu0 %v2023
        %2071 = vmatprep.subr.bf16.mxu0 0
        %2072 = vmatpush2.bf16.msra.mxu0 %v2038
        %2073 = vmatprep.subr.bf16.mxu0 0
        %2074 = vmatpush2.bf16.msra.mxu0 %v2037
        %2075 = vmatprep.subr.bf16.mxu0 0
        %2076 = vmatpush2.bf16.msra.mxu0 %v2036
        %2077 = vmatprep.subr.bf16.mxu0 0
        %2078 = vmatpush2.bf16.msra.mxu0 %v2035
        %2079 = vmatprep.subr.bf16.mxu0 0
        %2080 = vmatpush2.bf16.msra.mxu0 %v2034
        %2081 = vmatprep.subr.bf16.mxu0 0
        %2082 = vmatpush2.bf16.msra.mxu0 %v2033
        %2083 = vmatprep.subr.bf16.mxu0 0
        %2084 = vmatpush2.bf16.msra.mxu0 %v2032
        %2085 = vmatprep.subr.bf16.mxu0 0
        %2086 = vmatpush2.bf16.msra.mxu0 %v2031
        %2087 = vmatprep.mubr.bf16.mxu0 %v1926
        %2088 = vmatmul.mubr.bf16.gmra.mxu0 %v1925
        %v2089 = vpop.f32.mrf.mxu0
        %v2090 = vadd.f32 %v1485, %v2089
        %v2091 = vpop.f32.mrf.mxu0
        %v2092 = vpop.f32.mrf.mxu0
        %v2093 = vpop.f32.mrf.mxu0
        %2094 = vdwg.mxu0
        %v2095 = vadd.f32 %v2090, %v1886
        %v2096 = vld [vmem:[%s12] sm:$0x1]
        %v2098 = vlaneseq
        %v2099 = vshrl.u32 %v2098, 7
        %v2100 = vsub.s32 0, %v2099
        %v2101 = vrot.slane %v2096, %v2100
        %v2103 = vadd.f32 %v2095, %v2101
        %v2104 = vmax.f32 %v2103, 0.0
        %v2105 = vpack.c.bf16 %v2104, %v2104
        %v2106 = vld [vmem:[#allocation14] sm:$0xf]
        %v2107 = vld [vmem:[#allocation14 + $0x4] sm:$0xf]
        %v2108 = vld [vmem:[#allocation14 + $0x8] sm:$0xf]
        %v2109 = vld [vmem:[#allocation14 + $0xc] sm:$0xf]
        %v2110 = vld [vmem:[#allocation14 + $0x10] sm:$0xf]
        %v2111 = vld [vmem:[#allocation14 + $0x14] sm:$0xf]
        %v2112 = vld [vmem:[#allocation14 + $0x18] sm:$0xf]
        %v2113 = vld [vmem:[#allocation14 + $0x1c] sm:$0xf]
        %v2114 = vld [vmem:[#allocation14 + $0x20] sm:$0xf]
        %v2115 = vld [vmem:[#allocation14 + $0x24] sm:$0xf]
        %v2116 = vld [vmem:[#allocation14 + $0x28] sm:$0xf]
        %v2117 = vld [vmem:[#allocation14 + $0x2c] sm:$0xf]
        %v2118 = vld [vmem:[#allocation14 + $0x30] sm:$0xf]
        %v2119 = vld [vmem:[#allocation14 + $0x34] sm:$0xf]
        %v2120 = vld [vmem:[#allocation14 + $0x38] sm:$0xf]
        %v2121 = vld [vmem:[#allocation14 + $0x3c] sm:$0xf]
        %v2122 = vld [vmem:[%s14] sm:$0x1]
        %v2124 = vlaneseq
        %v2125 = vshrl.u32 %v2124, 7
        %v2126 = vsub.s32 0, %v2125
        %v2127 = vrot.slane %v2122, %v2126
        %v2145 = vunpack.c.l.b16 %v2106
        %v2146 = vunpack.c.l.b16 %v2107
        %v2147 = vunpack.c.l.b16 %v2108
        %v2148 = vunpack.c.l.b16 %v2109
        %v2149 = vunpack.c.l.b16 %v2110
        %v2150 = vunpack.c.l.b16 %v2111
        %v2151 = vunpack.c.l.b16 %v2112
        %v2152 = vunpack.c.l.b16 %v2113
        %v2153 = vunpack.c.l.b16 %v2114
        %v2154 = vunpack.c.l.b16 %v2115
        %v2155 = vunpack.c.l.b16 %v2116
        %v2156 = vunpack.c.l.b16 %v2117
        %v2157 = vunpack.c.l.b16 %v2118
        %v2158 = vunpack.c.l.b16 %v2119
        %v2159 = vunpack.c.l.b16 %v2120
        %v2160 = vunpack.c.l.b16 %v2121
        %v2161 = vpack.c.b16 %v2146, %v2145
        %v2162 = vpack.c.b16 %v2148, %v2147
        %v2163 = vpack.c.b16 %v2150, %v2149
        %v2164 = vpack.c.b16 %v2152, %v2151
        %v2165 = vpack.c.b16 %v2154, %v2153
        %v2166 = vpack.c.b16 %v2156, %v2155
        %v2167 = vpack.c.b16 %v2158, %v2157
        %v2168 = vpack.c.b16 %v2160, %v2159
        %2177 = vmatprep.subr.bf16.mxu0 0
        %2178 = vmatpush1.bf16.msra.mxu0 %v2168
        %2179 = vmatprep.subr.bf16.mxu0 0
        %2180 = vmatpush1.bf16.msra.mxu0 %v2167
        %2181 = vmatprep.subr.bf16.mxu0 0
        %2182 = vmatpush1.bf16.msra.mxu0 %v2166
        %2183 = vmatprep.subr.bf16.mxu0 0
        %2184 = vmatpush1.bf16.msra.mxu0 %v2165
        %2185 = vmatprep.subr.bf16.mxu0 0
        %2186 = vmatpush1.bf16.msra.mxu0 %v2164
        %2187 = vmatprep.subr.bf16.mxu0 0
        %2188 = vmatpush1.bf16.msra.mxu0 %v2163
        %2189 = vmatprep.subr.bf16.mxu0 0
        %2190 = vmatpush1.bf16.msra.mxu0 %v2162
        %2191 = vmatprep.subr.bf16.mxu0 0
        %2192 = vmatpush1.bf16.msra.mxu0 %v2161
        %2193 = vmatprep.subr.bf16.mxu0 0
        %2194 = vmatpush2.bf16.msra.mxu0 0
        %2195 = vmatprep.subr.bf16.mxu0 0
        %2196 = vmatpush2.bf16.msra.mxu0 0
        %2197 = vmatprep.subr.bf16.mxu0 0
        %2198 = vmatpush2.bf16.msra.mxu0 0
        %2199 = vmatprep.subr.bf16.mxu0 0
        %2200 = vmatpush2.bf16.msra.mxu0 0
        %2201 = vmatprep.subr.bf16.mxu0 0
        %2202 = vmatpush2.bf16.msra.mxu0 0
        %2203 = vmatprep.subr.bf16.mxu0 0
        %2204 = vmatpush2.bf16.msra.mxu0 0
        %2205 = vmatprep.subr.bf16.mxu0 0
        %2206 = vmatpush2.bf16.msra.mxu0 0
        %2207 = vmatprep.subr.bf16.mxu0 0
        %2208 = vmatpush2.bf16.msra.mxu0 0
        %2209 = vmatprep.mubr.bf16.mxu0 0
        %2210 = vmatmul.mubr.bf16.gmra.mxu0 %v2105
        %v2211 = vpop.f32.mrf.mxu0
        %v2212 = vadd.f32 %v2127, %v2211
        %v2213 = vpop.f32.mrf.mxu0
        %v2214 = vpop.f32.mrf.mxu0
        %v2215 = vpop.f32.mrf.mxu0
        %2216 = vdwg.mxu0
        %2217 = vst [vmem:[%s634] sm:$0xff] %v2212
        %s2218 = sand.u32 %s371, 1
        %s2219 = scalar_lea.sflag [#allocation4], %s2218
        %s2220 = sand.u32 %s371, 1
        %s2221 = smul.addr %s2220, 8
        %s2222 = scalar_lea.vmem [#allocation16], %s2221
        // Predicated region
        $region113: #{tpu_custom_call.1} parent=79 // pred_check
          %p2223 = pneg %p381
        $region114: #{tpu_custom_call.1} parent=79 // pred_check_branch
          %2225 = sbr.rel (%p2223) target = $region116
        $region115: #{tpu_custom_call.1} parent=79 // pred_region
          %s2227 = ssub.s32 128, 128
          %2228 = vsyncadd %s2219, %s2227
          %s2229 = smul.addr %s38, 128
          %s2230 = scalar_lea.hbm %s15, %s2229
          %s2232 = sshll.u32 %s2222, 4
          %s2233 = int_to_ptr.vmem [resolvable:$true] %s2232
          %2235 = dma.vmem_to_hbm [thread:$0]  %s2233, 128, %s2230, %s2219
        $region116: #{tpu_custom_call.1} parent=79 // pred_fallthru
          _
      $region80: #{tpu_custom_call.1} parent=5 // pred_fallthru
        _
      %p2236 = scmp.le.s32.totalorder 2, %s33
      // Predicated region
      $region117: #{tpu_custom_call.1} parent=5 // pred_check
        %p2237 = pneg %p2236
      $region118: #{tpu_custom_call.1} parent=5 // pred_check_branch
        %2239 = sbr.rel (%p2237) target = $region120
      $region119: #{tpu_custom_call.1} parent=5 // pred_region
        %s2240 = ssub.s32 %s33, 2
        // Predicated region
        $region121: #{tpu_custom_call.1} parent=119 // pred_check
          %p2241 = pneg %p387
        $region122: #{tpu_custom_call.1} parent=119 // pred_check_branch
          %2243 = sbr.rel (%p2241) target = $region124
        $region123: #{tpu_custom_call.1} parent=119 // pred_region
          %s2244 = sand.u32 %s372, 1
          %s2245 = scalar_lea.sflag [#allocation4], %s2244
          %s2246 = sand.u32 %s372, 1
          %s2247 = smul.addr %s2246, 8
          %s2248 = scalar_lea.vmem [#allocation16], %s2247
          %2249 = dma.done %s2245, 128
        $region124: #{tpu_custom_call.1} parent=119 // pred_fallthru
          _
      $region120: #{tpu_custom_call.1} parent=5 // pred_fallthru
        _
    $region6: #{tpu_custom_call.1} parent=1 // loop_footer
      %s37 = sadd.s32 1, %s33
    $region7: #{tpu_custom_call.1} parent=1 // loop_footer_branch
      %32 = sbr.rel target = $region3
    $region8: #{tpu_custom_call.1} parent=1 // loop_exit
      _
    %2250 = vsyncpa [#allocation3], 1
    %s2251 = scalar_lea.sflag [#allocation3], 1
    %2252 = vsyncpa %s2251, 1
    %2253 = vsyncpa [#allocation6], 1
    %s2254 = scalar_lea.sflag [#allocation6], 1
    %2255 = vsyncpa %s2254, 1
    %2256 = vsyncpa [#allocation9], 1
    %2257 = vsyncpa [#allocation12], 1
    %2258 = vsyncpa [#allocation15], 1
    %2259 = vsyncpa [#allocation4], 1
    %s2260 = scalar_lea.sflag [#allocation4], 1
    %2261 = vsyncpa %s2260, 1

</llo_original>
